<compile_context>
chip_gen: v7x
topology: tpu7x:2x2x1
jax: 0.10.0
libtpu: 0.0.40
codegen_flags: <defaults>
</compile_context>

<pallas_src>
import functools

import jax
import jax.numpy as jnp
from jax.experimental import pallas as pl
from jax.experimental.pallas import tpu as pltpu


def _round_up(x, m):
    return (x + m - 1) // m * m


def _vmem_limit_bytes():
    """Generation-aware VMEM budget: ~100 MiB on v5e/v6e (128 MiB per core),
    48 MiB on v7x (64 MiB per core).  Falls back to the v7x-safe value."""
    try:
        cap = pltpu.get_tpu_info().vmem_capacity_bytes
    except Exception:  # query unavailable -> conservative, safe everywhere
        cap = 64 * 1024 * 1024
    if cap >= 128 * 1024 * 1024:
        return 100 * 1024 * 1024
    return 48 * 1024 * 1024


def _divisor_block(dim_pad, target):
    """Largest multiple of 128 that divides dim_pad and is <= target."""
    b = max(128, (min(target, dim_pad) // 128) * 128)
    while dim_pad % b:
        b -= 128
    return b


def _linear_act_kernel(x_ref, w_ref, b_ref, o_ref, acc_ref, *, activation):
    k = pl.program_id(2)

    @pl.when(k == 0)
    def _():
        acc_ref[...] = jnp.zeros_like(acc_ref)

    # bf16 MXU matmul, f32 accumulation in VMEM scratch.
    acc_ref[...] += jnp.dot(x_ref[...], w_ref[...],
                            preferred_element_type=jnp.float32)

    @pl.when(k == pl.num_programs(2) - 1)
    def _():
        y = acc_ref[...] + b_ref[...]          # f32 bias after accumulation
        if activation == "relu":
            y = jnp.maximum(y, 0.0)            # VPU
        elif activation == "sigmoid":
            y = jax.nn.sigmoid(y)              # EUP (exp + reciprocal)
        o_ref[...] = y.astype(o_ref.dtype)


def _linear_pallas(x, w, b, *, activation, out_dtype):
    """y = act(x @ w + b) with x:[M,K], w:[K,N] (pre-transposed), b:[1,N]."""
    M, K = x.shape
    Kw, N = w.shape
    assert K == Kw and b.shape == (1, N)

    # ---- tile sizes: 256..512-wide K/N (MXU-friendly), modest M tile -------
    block_k = min(512, _round_up(K, 128))
    block_n = min(512, _round_up(N, 128))
    block_m = min(256, _round_up(M, 8))

    K_pad = _round_up(K, block_k)
    N_pad = _round_up(N, block_n)
    M_pad = _round_up(M, block_m)

    # v7x megacore occupancy: ensure >=2 "parallel" grid steps when possible,
    # splitting on N so each TensorCore streams only half of the weights.
    if (M_pad // block_m) * (N_pad // block_n) < 2 and N_pad > 128:
        block_n = _divisor_block(N_pad, max(128, block_n // 2))

    grid = (M_pad // block_m, N_pad // block_n, K_pad // block_k)

    # ---- zero-pad to the tile grid (exact: padded K rows of w are zero) ----
    x_p = jnp.pad(x, ((0, M_pad - M), (0, K_pad - K)))
    w_p = jnp.pad(w, ((0, K_pad - K), (0, N_pad - N)))
    b_p = jnp.pad(b, ((0, 0), (0, N_pad - N)))

    flops = 2 * M_pad * K_pad * N_pad
    transcendentals = 2 * M_pad * N_pad if activation == "sigmoid" else 0
    bytes_accessed = (x_p.size * x_p.dtype.itemsize
                      + w_p.size * w_p.dtype.itemsize
                      + b_p.size * b_p.dtype.itemsize
                      + M_pad * N_pad * jnp.dtype(out_dtype).itemsize)

    out = pl.pallas_call(
        functools.partial(_linear_act_kernel, activation=activation),
        out_shape=jax.ShapeDtypeStruct((M_pad, N_pad), out_dtype),
        grid_spec=pltpu.PrefetchScalarGridSpec(
            num_scalar_prefetch=0,
            grid=grid,
            in_specs=[
                # activation tile: lane-dense K, streamed over the K axis
                pl.BlockSpec((block_m, block_k), lambda i, j, k: (i, k)),
                # weight tile: streamed over (K, N); not VMEM-resident
                pl.BlockSpec((block_k, block_n), lambda i, j, k: (k, j)),
                # bias tile per output-column block
                pl.BlockSpec((1, block_n), lambda i, j, k: (0, j)),
            ],
            out_specs=pl.BlockSpec((block_m, block_n), lambda i, j, k: (i, j)),
            scratch_shapes=[pltpu.VMEM((block_m, block_n), jnp.float32)],
        ),
        compiler_params=pltpu.CompilerParams(
            dimension_semantics=("parallel", "parallel", "arbitrary"),
            vmem_limit_bytes=_vmem_limit_bytes(),
        ),
        cost_estimate=pl.CostEstimate(flops=flops,
                                      transcendentals=transcendentals,
                                      bytes_accessed=bytes_accessed),
    )(x_p, w_p, b_p)

    return out[:M, :N]


@jax.jit
def generator_forward(x, w0, b0, w1, b1, w2, b2):
    """x: [B, z_dim] bf16 -> [B, output_dim] f32 (mirrors Generator.forward)."""
    h0 = _linear_pallas(x, w0, b0, activation="relu", out_dtype=jnp.bfloat16)
    h1 = _linear_pallas(h0, w1, b1, activation="sigmoid",
                        out_dtype=jnp.bfloat16)
    y = _linear_pallas(h1, w2, b2, activation="none", out_dtype=jnp.float32)
    return y


def init_generator_params(key, z_dim, hidden_dim, output_dim):
    """Deterministic init mirroring torch.nn.Linear (U[-1/sqrt(fan_in), +...]).

    Weights are stored as [in_features, out_features] (i.e. already W.T) and
    cast to bf16; biases stay f32 (added after the f32 accumulation)."""
    ks = jax.random.split(key, 6)

    def linear(kw, kb, fan_in, fan_out):
        bound = 1.0 / jnp.sqrt(fan_in)
        w = jax.random.uniform(kw, (fan_in, fan_out), jnp.float32, -bound, bound)
        b = jax.random.uniform(kb, (1, fan_out), jnp.float32, -bound, bound)
        return w.astype(jnp.bfloat16), b

    w0, b0 = linear(ks[0], ks[1], z_dim, hidden_dim)
    w1, b1 = linear(ks[2], ks[3], hidden_dim, hidden_dim)
    w2, b2 = linear(ks[4], ks[5], hidden_dim, output_dim)
    return w0, b0, w1, b1, w2, b2


def generator_ref(x, w0, b0, w1, b1, w2, b2):
    """Pure-JAX reference with the same bf16-matmul / f32-accumulate recipe."""
    h0 = jnp.maximum(
        jnp.dot(x, w0, preferred_element_type=jnp.float32) + b0, 0.0)
    h0 = h0.astype(jnp.bfloat16)
    h1 = jax.nn.sigmoid(
        jnp.dot(h0, w1, preferred_element_type=jnp.float32) + b1)
    h1 = h1.astype(jnp.bfloat16)
    return jnp.dot(h1, w2, preferred_element_type=jnp.float32) + b2


if __name__ == "__main__":
    # Small shapes consistent with the module (scaled down from 8000/8000/3072);
    # deliberately NOT multiples of 128 to exercise the padding path.
    batch, z_dim, hidden_dim, output_dim = 20, 200, 272, 192

    key = jax.random.PRNGKey(0)
    kx, kp = jax.random.split(key)
    x = jax.random.normal(kx, (batch, z_dim), jnp.float32).astype(jnp.bfloat16)
    params = init_generator_params(kp, z_dim, hidden_dim, output_dim)

    y = jax.block_until_ready(generator_forward(x, *params))
    y_ref = generator_ref(x, *params)

    assert y.shape == (batch, output_dim)
    assert bool(jnp.allclose(y, y_ref, atol=2e-2, rtol=2e-2)), \
        "mismatch vs reference"

    print("KERNEL_OK")
</pallas_src>

<mosaic_0001>
module attributes {stable_mosaic.version = 11 : i64} {
  func.func @_linear_act_kernel(%arg0: i32, %arg1: i32, %arg2: i32, %arg3: memref<24x384xbf16, #tpu.memory_space<vmem>>, %arg4: memref<384x128xbf16, #tpu.memory_space<vmem>>, %arg5: memref<1x128xf32, #tpu.memory_space<vmem>>, %arg6: memref<24x128xbf16, #tpu.memory_space<vmem>>, %arg7: memref<24x128xf32, #tpu.memory_space<vmem>>) attributes {dimension_semantics = [#tpu.dimension_semantics<parallel>, #tpu.dimension_semantics<parallel>, #tpu.dimension_semantics<arbitrary>], iteration_bounds = array<i64: 1, 3, 1>, scalar_prefetch = 0 : i64, scratch_operands = 1 : i64, tpu.core_type = #tpu.core_type<tc>, window_params = [{transform_indices = @transform_0, window_bounds = array<i64: 24, 384>}, {transform_indices = @transform_1, window_bounds = array<i64: 384, 128>}, {transform_indices = @transform_2, window_bounds = array<i64: 1, 128>}, {transform_indices = @transform_3, window_bounds = array<i64: 24, 128>}]} {
    %c0_i32 = arith.constant 0 : i32
    %0 = arith.cmpi eq, %arg2, %c0_i32 : i32
    %1 = arith.extui %0 : i1 to i32
    %c0_i32_0 = arith.constant 0 : i32
    %2 = arith.cmpi ne, %1, %c0_i32_0 : i32
    scf.if %2 {
      %cst_10 = arith.constant 0.000000e+00 : f32
      %12 = vector.broadcast %cst_10 : f32 to vector<24x128xf32>
      %c0_11 = arith.constant 0 : index
      %c0_12 = arith.constant 0 : index
      %13 = vector.load %arg7[%c0_11, %c0_12] : memref<24x128xf32, #tpu.memory_space<vmem>>, vector<24x128xf32>
      tpu.vector_store %arg7[%c0_11, %c0_12], %12 {strides = array<i32>} : memref<24x128xf32, #tpu.memory_space<vmem>>, vector<24x128xf32>,
    } else {
    }
    %c0 = arith.constant 0 : index
    %c0_1 = arith.constant 0 : index
    %3 = vector.load %arg7[%c0, %c0_1] : memref<24x128xf32, #tpu.memory_space<vmem>>, vector<24x128xf32>
    %c0_2 = arith.constant 0 : index
    %c0_3 = arith.constant 0 : index
    %4 = vector.load %arg3[%c0_2, %c0_3] : memref<24x384xbf16, #tpu.memory_space<vmem>>, vector<24x384xbf16>
    %c0_4 = arith.constant 0 : index
    %c0_5 = arith.constant 0 : index
    %5 = vector.load %arg4[%c0_4, %c0_5] : memref<384x128xbf16, #tpu.memory_space<vmem>>, vector<384x128xbf16>
    %cst = arith.constant dense<0.000000e+00> : vector<24x128xf32>
    %6 = tpu.matmul %4, %5, %cst {dimension_numbers = #tpu.dot_dimension_numbers<[1], [0], [0], [1], [0, 0, 1, 1], [], []>} : vector<24x384xbf16>, vector<384x128xbf16>, vector<24x128xf32> -> vector<24x128xf32>
    %7 = arith.addf %3, %6 : vector<24x128xf32>
    %c0_6 = arith.constant 0 : index
    %c0_7 = arith.constant 0 : index
    %8 = vector.load %arg7[%c0_6, %c0_7] : memref<24x128xf32, #tpu.memory_space<vmem>>, vector<24x128xf32>
    tpu.vector_store %arg7[%c0_6, %c0_7], %7 {strides = array<i32>} : memref<24x128xf32, #tpu.memory_space<vmem>>, vector<24x128xf32>,
    %c0_i32_8 = arith.constant 0 : i32
    %9 = arith.cmpi eq, %arg2, %c0_i32_8 : i32
    %10 = arith.extui %9 : i1 to i32
    %c0_i32_9 = arith.constant 0 : i32
    %11 = arith.cmpi ne, %10, %c0_i32_9 : i32
    scf.if %11 {
      %c0_10 = arith.constant 0 : index
      %c0_11 = arith.constant 0 : index
      %12 = vector.load %arg7[%c0_10, %c0_11] : memref<24x128xf32, #tpu.memory_space<vmem>>, vector<24x128xf32>
      %c0_12 = arith.constant 0 : index
      %c0_13 = arith.constant 0 : index
      %13 = vector.load %arg5[%c0_12, %c0_13] : memref<1x128xf32, #tpu.memory_space<vmem>>, vector<1x128xf32>
      %14 = vector.broadcast %13 : vector<1x128xf32> to vector<24x128xf32>
      %15 = arith.addf %12, %14 : vector<24x128xf32>
      %16 = arith.negf %15 : vector<24x128xf32>
      %17 = math.exp %16 : vector<24x128xf32>
      %cst_14 = arith.constant 1.000000e+00 : f32
      %18 = vector.broadcast %cst_14 : f32 to vector<24x128xf32>
      %19 = arith.addf %18, %17 : vector<24x128xf32>
      %20 = arith.divf %18, %19 : vector<24x128xf32>
      %21 = arith.truncf %20 : vector<24x128xf32> to vector<24x128xbf16>
      %c0_15 = arith.constant 0 : index
      %c0_16 = arith.constant 0 : index
      %22 = vector.load %arg6[%c0_15, %c0_16] : memref<24x128xbf16, #tpu.memory_space<vmem>>, vector<24x128xbf16>
      tpu.vector_store %arg6[%c0_15, %c0_16], %21 {strides = array<i32>} : memref<24x128xbf16, #tpu.memory_space<vmem>>, vector<24x128xbf16>,
    } else {
    }
    return
  }
  func.func @transform_0(%arg0: i32, %arg1: i32, %arg2: i32) -> (i32, i32) {
    %c0_i32 = arith.constant 0 : i32
    return %arg0, %arg2 : i32, i32
  }
  func.func @transform_1(%arg0: i32, %arg1: i32, %arg2: i32) -> (i32, i32) {
    %c0_i32 = arith.constant 0 : i32
    return %arg2, %arg1 : i32, i32
  }
  func.func @transform_2(%arg0: i32, %arg1: i32, %arg2: i32) -> (i32, i32) {
    %c0_i32 = arith.constant 0 : i32
    %c0_i32_0 = arith.constant 0 : i32
    return %c0_i32, %arg1 : i32, i32
  }
  func.func @transform_3(%arg0: i32, %arg1: i32, %arg2: i32) -> (i32, i32) {
    %c0_i32 = arith.constant 0 : i32
    return %arg0, %arg1 : i32, i32
  }
}

module attributes {stable_mosaic.version = 11 : i64} {
  func.func @_linear_act_kernel(%arg0: i32, %arg1: i32, %arg2: i32, %arg3: memref<24x256xbf16, #tpu.memory_space<vmem>>, %arg4: memref<256x128xbf16, #tpu.memory_space<vmem>>, %arg5: memref<1x128xf32, #tpu.memory_space<vmem>>, %arg6: memref<24x128xbf16, #tpu.memory_space<vmem>>, %arg7: memref<24x128xf32, #tpu.memory_space<vmem>>) attributes {dimension_semantics = [#tpu.dimension_semantics<parallel>, #tpu.dimension_semantics<parallel>, #tpu.dimension_semantics<arbitrary>], iteration_bounds = array<i64: 1, 3, 1>, scalar_prefetch = 0 : i64, scratch_operands = 1 : i64, tpu.core_type = #tpu.core_type<tc>, window_params = [{transform_indices = @transform_0, window_bounds = array<i64: 24, 256>}, {transform_indices = @transform_1, window_bounds = array<i64: 256, 128>}, {transform_indices = @transform_2, window_bounds = array<i64: 1, 128>}, {transform_indices = @transform_3, window_bounds = array<i64: 24, 128>}]} {
    %c0_i32 = arith.constant 0 : i32
    %0 = arith.cmpi eq, %arg2, %c0_i32 : i32
    %1 = arith.extui %0 : i1 to i32
    %c0_i32_0 = arith.constant 0 : i32
    %2 = arith.cmpi ne, %1, %c0_i32_0 : i32
    scf.if %2 {
      %cst_10 = arith.constant 0.000000e+00 : f32
      %12 = vector.broadcast %cst_10 : f32 to vector<24x128xf32>
      %c0_11 = arith.constant 0 : index
      %c0_12 = arith.constant 0 : index
      %13 = vector.load %arg7[%c0_11, %c0_12] : memref<24x128xf32, #tpu.memory_space<vmem>>, vector<24x128xf32>
      tpu.vector_store %arg7[%c0_11, %c0_12], %12 {strides = array<i32>} : memref<24x128xf32, #tpu.memory_space<vmem>>, vector<24x128xf32>,
    } else {
    }
    %c0 = arith.constant 0 : index
    %c0_1 = arith.constant 0 : index
    %3 = vector.load %arg7[%c0, %c0_1] : memref<24x128xf32, #tpu.memory_space<vmem>>, vector<24x128xf32>
    %c0_2 = arith.constant 0 : index
    %c0_3 = arith.constant 0 : index
    %4 = vector.load %arg3[%c0_2, %c0_3] : memref<24x256xbf16, #tpu.memory_space<vmem>>, vector<24x256xbf16>
    %c0_4 = arith.constant 0 : index
    %c0_5 = arith.constant 0 : index
    %5 = vector.load %arg4[%c0_4, %c0_5] : memref<256x128xbf16, #tpu.memory_space<vmem>>, vector<256x128xbf16>
    %cst = arith.constant dense<0.000000e+00> : vector<24x128xf32>
    %6 = tpu.matmul %4, %5, %cst {dimension_numbers = #tpu.dot_dimension_numbers<[1], [0], [0], [1], [0, 0, 1, 1], [], []>} : vector<24x256xbf16>, vector<256x128xbf16>, vector<24x128xf32> -> vector<24x128xf32>
    %7 = arith.addf %3, %6 : vector<24x128xf32>
    %c0_6 = arith.constant 0 : index
    %c0_7 = arith.constant 0 : index
    %8 = vector.load %arg7[%c0_6, %c0_7] : memref<24x128xf32, #tpu.memory_space<vmem>>, vector<24x128xf32>
    tpu.vector_store %arg7[%c0_6, %c0_7], %7 {strides = array<i32>} : memref<24x128xf32, #tpu.memory_space<vmem>>, vector<24x128xf32>,
    %c0_i32_8 = arith.constant 0 : i32
    %9 = arith.cmpi eq, %arg2, %c0_i32_8 : i32
    %10 = arith.extui %9 : i1 to i32
    %c0_i32_9 = arith.constant 0 : i32
    %11 = arith.cmpi ne, %10, %c0_i32_9 : i32
    scf.if %11 {
      %c0_10 = arith.constant 0 : index
      %c0_11 = arith.constant 0 : index
      %12 = vector.load %arg7[%c0_10, %c0_11] : memref<24x128xf32, #tpu.memory_space<vmem>>, vector<24x128xf32>
      %c0_12 = arith.constant 0 : index
      %c0_13 = arith.constant 0 : index
      %13 = vector.load %arg5[%c0_12, %c0_13] : memref<1x128xf32, #tpu.memory_space<vmem>>, vector<1x128xf32>
      %14 = vector.broadcast %13 : vector<1x128xf32> to vector<24x128xf32>
      %15 = arith.addf %12, %14 : vector<24x128xf32>
      %cst_14 = arith.constant 0.000000e+00 : f32
      %16 = vector.broadcast %cst_14 : f32 to vector<24x128xf32>
      %17 = arith.maximumf %15, %16 : vector<24x128xf32>
      %18 = arith.truncf %17 : vector<24x128xf32> to vector<24x128xbf16>
      %c0_15 = arith.constant 0 : index
      %c0_16 = arith.constant 0 : index
      %19 = vector.load %arg6[%c0_15, %c0_16] : memref<24x128xbf16, #tpu.memory_space<vmem>>, vector<24x128xbf16>
      tpu.vector_store %arg6[%c0_15, %c0_16], %18 {strides = array<i32>} : memref<24x128xbf16, #tpu.memory_space<vmem>>, vector<24x128xbf16>,
    } else {
    }
    return
  }
  func.func @transform_0(%arg0: i32, %arg1: i32, %arg2: i32) -> (i32, i32) {
    %c0_i32 = arith.constant 0 : i32
    return %arg0, %arg2 : i32, i32
  }
  func.func @transform_1(%arg0: i32, %arg1: i32, %arg2: i32) -> (i32, i32) {
    %c0_i32 = arith.constant 0 : i32
    return %arg2, %arg1 : i32, i32
  }
  func.func @transform_2(%arg0: i32, %arg1: i32, %arg2: i32) -> (i32, i32) {
    %c0_i32 = arith.constant 0 : i32
    %c0_i32_0 = arith.constant 0 : i32
    return %c0_i32, %arg1 : i32, i32
  }
  func.func @transform_3(%arg0: i32, %arg1: i32, %arg2: i32) -> (i32, i32) {
    %c0_i32 = arith.constant 0 : i32
    return %arg0, %arg1 : i32, i32
  }
}

module attributes {stable_mosaic.version = 11 : i64} {
  func.func @_linear_act_kernel(%arg0: i32, %arg1: i32, %arg2: i32, %arg3: memref<24x384xbf16, #tpu.memory_space<vmem>>, %arg4: memref<384x128xbf16, #tpu.memory_space<vmem>>, %arg5: memref<1x128xf32, #tpu.memory_space<vmem>>, %arg6: memref<24x128xf32, #tpu.memory_space<vmem>>, %arg7: memref<24x128xf32, #tpu.memory_space<vmem>>) attributes {dimension_semantics = [#tpu.dimension_semantics<parallel>, #tpu.dimension_semantics<parallel>, #tpu.dimension_semantics<arbitrary>], iteration_bounds = array<i64: 1, 2, 1>, scalar_prefetch = 0 : i64, scratch_operands = 1 : i64, tpu.core_type = #tpu.core_type<tc>, window_params = [{transform_indices = @transform_0, window_bounds = array<i64: 24, 384>}, {transform_indices = @transform_1, window_bounds = array<i64: 384, 128>}, {transform_indices = @transform_2, window_bounds = array<i64: 1, 128>}, {transform_indices = @transform_3, window_bounds = array<i64: 24, 128>}]} {
    %c0_i32 = arith.constant 0 : i32
    %0 = arith.cmpi eq, %arg2, %c0_i32 : i32
    %1 = arith.extui %0 : i1 to i32
    %c0_i32_0 = arith.constant 0 : i32
    %2 = arith.cmpi ne, %1, %c0_i32_0 : i32
    scf.if %2 {
      %cst_10 = arith.constant 0.000000e+00 : f32
      %12 = vector.broadcast %cst_10 : f32 to vector<24x128xf32>
      %c0_11 = arith.constant 0 : index
      %c0_12 = arith.constant 0 : index
      %13 = vector.load %arg7[%c0_11, %c0_12] : memref<24x128xf32, #tpu.memory_space<vmem>>, vector<24x128xf32>
      tpu.vector_store %arg7[%c0_11, %c0_12], %12 {strides = array<i32>} : memref<24x128xf32, #tpu.memory_space<vmem>>, vector<24x128xf32>,
    } else {
    }
    %c0 = arith.constant 0 : index
    %c0_1 = arith.constant 0 : index
    %3 = vector.load %arg7[%c0, %c0_1] : memref<24x128xf32, #tpu.memory_space<vmem>>, vector<24x128xf32>
    %c0_2 = arith.constant 0 : index
    %c0_3 = arith.constant 0 : index
    %4 = vector.load %arg3[%c0_2, %c0_3] : memref<24x384xbf16, #tpu.memory_space<vmem>>, vector<24x384xbf16>
    %c0_4 = arith.constant 0 : index
    %c0_5 = arith.constant 0 : index
    %5 = vector.load %arg4[%c0_4, %c0_5] : memref<384x128xbf16, #tpu.memory_space<vmem>>, vector<384x128xbf16>
    %cst = arith.constant dense<0.000000e+00> : vector<24x128xf32>
    %6 = tpu.matmul %4, %5, %cst {dimension_numbers = #tpu.dot_dimension_numbers<[1], [0], [0], [1], [0, 0, 1, 1], [], []>} : vector<24x384xbf16>, vector<384x128xbf16>, vector<24x128xf32> -> vector<24x128xf32>
    %7 = arith.addf %3, %6 : vector<24x128xf32>
    %c0_6 = arith.constant 0 : index
    %c0_7 = arith.constant 0 : index
    %8 = vector.load %arg7[%c0_6, %c0_7] : memref<24x128xf32, #tpu.memory_space<vmem>>, vector<24x128xf32>
    tpu.vector_store %arg7[%c0_6, %c0_7], %7 {strides = array<i32>} : memref<24x128xf32, #tpu.memory_space<vmem>>, vector<24x128xf32>,
    %c0_i32_8 = arith.constant 0 : i32
    %9 = arith.cmpi eq, %arg2, %c0_i32_8 : i32
    %10 = arith.extui %9 : i1 to i32
    %c0_i32_9 = arith.constant 0 : i32
    %11 = arith.cmpi ne, %10, %c0_i32_9 : i32
    scf.if %11 {
      %c0_10 = arith.constant 0 : index
      %c0_11 = arith.constant 0 : index
      %12 = vector.load %arg7[%c0_10, %c0_11] : memref<24x128xf32, #tpu.memory_space<vmem>>, vector<24x128xf32>
      %c0_12 = arith.constant 0 : index
      %c0_13 = arith.constant 0 : index
      %13 = vector.load %arg5[%c0_12, %c0_13] : memref<1x128xf32, #tpu.memory_space<vmem>>, vector<1x128xf32>
      %14 = vector.broadcast %13 : vector<1x128xf32> to vector<24x128xf32>
      %15 = arith.addf %12, %14 : vector<24x128xf32>
      %c0_14 = arith.constant 0 : index
      %c0_15 = arith.constant 0 : index
      %16 = vector.load %arg6[%c0_14, %c0_15] : memref<24x128xf32, #tpu.memory_space<vmem>>, vector<24x128xf32>
      tpu.vector_store %arg6[%c0_14, %c0_15], %15 {strides = array<i32>} : memref<24x128xf32, #tpu.memory_space<vmem>>, vector<24x128xf32>,
    } else {
    }
    return
  }
  func.func @transform_0(%arg0: i32, %arg1: i32, %arg2: i32) -> (i32, i32) {
    %c0_i32 = arith.constant 0 : i32
    return %arg0, %arg2 : i32, i32
  }
  func.func @transform_1(%arg0: i32, %arg1: i32, %arg2: i32) -> (i32, i32) {
    %c0_i32 = arith.constant 0 : i32
    return %arg2, %arg1 : i32, i32
  }
  func.func @transform_2(%arg0: i32, %arg1: i32, %arg2: i32) -> (i32, i32) {
    %c0_i32 = arith.constant 0 : i32
    %c0_i32_0 = arith.constant 0 : i32
    return %c0_i32, %arg1 : i32, i32
  }
  func.func @transform_3(%arg0: i32, %arg1: i32, %arg2: i32) -> (i32, i32) {
    %c0_i32 = arith.constant 0 : i32
    return %arg0, %arg1 : i32, i32
  }
}

</mosaic_0001>

<llo_original>
// kernel: generator_forward.3
$region0: #{generator_forward.3}
  #allocation0 [shape = 'u32[]', space=smem, size = 0x4, offset = 0x4, fixed_abs, tag = 'smem constant byte address 0x4 - core index']
  #allocation1 [shape = 'u32[144,128]{1,0:T(1,128)}', space=vmem, size = 0x12000, scoped, tag = 'internal scratch']
  #allocation2 [shape = 'f32[24,128]{1,0:T(8,128)}', space=vmem, size = 0x3000, scoped, tag = 'scratch operand']
  %s0 = inlined_call_operand.vmem [shape: bf16[24,256], index: 0, kind: input, shape index: {}]
  %s1 = inlined_call_operand.vmem [shape: bf16[256,384], index: 1, kind: input, shape index: {}]
  %s2 = inlined_call_operand.vmem [shape: f32[1,384], index: 2, kind: input, shape index: {}]
  %s3 = inlined_call_operand.vmem [shape: bf16[24,384], index: 3, kind: output, shape index: {}]
  %s4 = sld [smem:[#allocation0]]
  $region131: #{generator_forward.3} parent=0
    _
  %s6 = ssub.s32 1, %s4
  %s7 = scalar_select 0, %s6, %s4
  $region1: #{generator_forward.3} parent=0
    #allocation3 [shape = 'u8[131072]{0}', space=vmem, size = 0x20000, scoped, tag = 'input window, operand 1']
    #allocation4 [shape = 'u8[12288]{0}', space=vmem, size = 0x3000, scoped, tag = 'output window, operand 0']
    loop: start=0, step=1, limit=5
    $region2: #{generator_forward.3} parent=1 // loop_pre_header
      _
    $region3: #{generator_forward.3} parent=1 // loop_header
      %s9 = sphi 0, %s13
      %p10 = scmp.ge.s32.totalorder %s9, 5
      %s16 = sphi 0, %s35
      %s17 = sphi 0, %s31
      %s18 = sphi 0, %s27
      %s19 = sphi 0, %s16
      %s20 = sphi 0, %s17
      %s21 = sphi 0, %s18
      %s22 = sphi 0, %s19
      %s23 = sphi 0, %s20
      %s24 = sphi 0, %s21
      %s40 = sphi 0, %s42
      %s43 = sphi 0, %s40
      %s44 = sphi 0, %s43
      %s60 = sphi 0, %s44
      %s68 = sphi 0, %s70
      %s71 = sphi 0, %s68
      %s72 = sphi 0, %s71
      %s88 = sphi 0, %s72
      %s94 = sphi 0, %s96
      %s97 = sphi 0, %s94
      %s98 = sphi 0, %s97
      %s114 = sphi 0, %s98
      %s122 = sphi 0, %s124
      %s125 = sphi 0, %s122
      %s126 = sphi 0, %s125
      %s142 = sphi 0, %s126
    $region4: #{generator_forward.3} parent=1 // loop_header_branch
      %12 = sbr.rel (%p10) target = $region8
    $region5: #{generator_forward.3} parent=1 // loop_body
      %s14 = ssub.s32 %s9, 1
      %s15 = ssub.s32 %s9, 2
      %s25 = sadd.s32 1, %s18
      %p26 = scmp.ge.s32.totalorder %s25, 1
      %s27 = scalar_select %p26, 0, %s25
      %s28 = sadd.s32 1, %s17
      %s29 = scalar_select %p26, %s28, %s17
      %p30 = scmp.ge.s32.totalorder %s29, 3
      %s31 = scalar_select %p30, 0, %s29
      %s32 = sadd.s32 1, %s16
      %s33 = scalar_select %p30, %s32, %s16
      %p34 = scmp.ge.s32.totalorder %s33, 1
      %s35 = scalar_select %p34, 0, %s33
      %s36 = ssub.s32 %s16, %s35
      %s37 = ssub.s32 %s18, %s27
      %s38 = sor.u32 %s36, %s37
      %p39 = scmp.eq.s32.totalorder %s38, 0
      %s41 = sadd.s32 %s40, 1
      %s42 = scalar_select %p39, %s40, %s41
      %p45 = pneg %p39
      %p46 = scmp.eq.s32.totalorder %s9, 2
      %p47 = por %p45, %p46
      %p48 = scmp.ne.s32.totalorder %s40, %s43
      %p49 = scmp.eq.s32.totalorder %s9, 0
      %p50 = por %p48, %p49
      %p51 = scmp.ne.s32.totalorder %s40, %s43
      %p52 = scmp.eq.s32.totalorder %s14, 2
      %p53 = por %p51, %p52
      %p54 = scmp.ne.s32.totalorder %s43, %s44
      %p55 = scmp.eq.s32.totalorder %s14, 0
      %p56 = por %p54, %p55
      %p57 = scmp.ne.s32.totalorder %s43, %s44
      %p58 = scmp.eq.s32.totalorder %s15, 2
      %p59 = por %p57, %p58
      %p61 = scmp.ne.s32.totalorder %s44, %s60
      %p62 = scmp.eq.s32.totalorder %s15, 0
      %p63 = por %p61, %p62
      %s64 = ssub.s32 %s18, %s27
      %s65 = ssub.s32 %s17, %s31
      %s66 = sor.u32 %s64, %s65
      %p67 = scmp.eq.s32.totalorder %s66, 0
      %s69 = sadd.s32 %s68, 1
      %s70 = scalar_select %p67, %s68, %s69
      %p73 = pneg %p67
      %p74 = scmp.eq.s32.totalorder %s9, 2
      %p75 = por %p73, %p74
      %p76 = scmp.ne.s32.totalorder %s68, %s71
      %p77 = scmp.eq.s32.totalorder %s9, 0
      %p78 = por %p76, %p77
      %p79 = scmp.ne.s32.totalorder %s68, %s71
      %p80 = scmp.eq.s32.totalorder %s14, 2
      %p81 = por %p79, %p80
      %p82 = scmp.ne.s32.totalorder %s71, %s72
      %p83 = scmp.eq.s32.totalorder %s14, 0
      %p84 = por %p82, %p83
      %p85 = scmp.ne.s32.totalorder %s71, %s72
      %p86 = scmp.eq.s32.totalorder %s15, 2
      %p87 = por %p85, %p86
      %p89 = scmp.ne.s32.totalorder %s72, %s88
      %p90 = scmp.eq.s32.totalorder %s15, 0
      %p91 = por %p89, %p90
      %s92 = ssub.s32 %s17, %s31
      %p93 = scmp.eq.s32.totalorder %s92, 0
      %s95 = sadd.s32 %s94, 1
      %s96 = scalar_select %p93, %s94, %s95
      %p99 = pneg %p93
      %p100 = scmp.eq.s32.totalorder %s9, 2
      %p101 = por %p99, %p100
      %p102 = scmp.ne.s32.totalorder %s94, %s97
      %p103 = scmp.eq.s32.totalorder %s9, 0
      %p104 = por %p102, %p103
      %p105 = scmp.ne.s32.totalorder %s94, %s97
      %p106 = scmp.eq.s32.totalorder %s14, 2
      %p107 = por %p105, %p106
      %p108 = scmp.ne.s32.totalorder %s97, %s98
      %p109 = scmp.eq.s32.totalorder %s14, 0
      %p110 = por %p108, %p109
      %p111 = scmp.ne.s32.totalorder %s97, %s98
      %p112 = scmp.eq.s32.totalorder %s15, 2
      %p113 = por %p111, %p112
      %p115 = scmp.ne.s32.totalorder %s98, %s114
      %p116 = scmp.eq.s32.totalorder %s15, 0
      %p117 = por %p115, %p116
      %s118 = ssub.s32 %s16, %s35
      %s119 = ssub.s32 %s17, %s31
      %s120 = sor.u32 %s118, %s119
      %p121 = scmp.eq.s32.totalorder %s120, 0
      %s123 = sadd.s32 %s122, 1
      %s124 = scalar_select %p121, %s122, %s123
      %p127 = pneg %p121
      %p128 = scmp.eq.s32.totalorder %s9, 2
      %p129 = por %p127, %p128
      %p130 = scmp.ne.s32.totalorder %s122, %s125
      %p131 = scmp.eq.s32.totalorder %s9, 0
      %p132 = por %p130, %p131
      %p133 = scmp.ne.s32.totalorder %s122, %s125
      %p134 = scmp.eq.s32.totalorder %s14, 2
      %p135 = por %p133, %p134
      %p136 = scmp.ne.s32.totalorder %s125, %s126
      %p137 = scmp.eq.s32.totalorder %s14, 0
      %p138 = por %p136, %p137
      %p139 = scmp.ne.s32.totalorder %s125, %s126
      %p140 = scmp.eq.s32.totalorder %s15, 2
      %p141 = por %p139, %p140
      %p143 = scmp.ne.s32.totalorder %s126, %s142
      %p144 = scmp.eq.s32.totalorder %s15, 0
      %p145 = por %p143, %p144
      %p146 = scmp.le.s32.totalorder 1, %s9
      %p147 = scmp.lt.s32.totalorder %s9, 4
      %p148 = pnand %p146, %p147
      %p149 = pneg %p148
      // Predicated region
      $region9: #{generator_forward.3} parent=5 // pred_check
        _
      $region10: #{generator_forward.3} parent=5 // pred_check_branch
        %151 = sbr.rel (%p148) target = $region12
      $region11: #{generator_forward.3} parent=5 // pred_region
        %s152 = ssub.s32 %s9, 1
        // Predicated region
        $region13: #{generator_forward.3} parent=11 // pred_check
          %p153 = pneg %p56
        $region14: #{generator_forward.3} parent=11 // pred_check_branch
          %155 = sbr.rel (%p153) target = $region16
        $region15: #{generator_forward.3} parent=11 // pred_region
          %s156 = smul.u32 3, %s19
          %s157 = smul.u32 2, %s21
          %p158 = scmp.lt.s32.totalorder %s156, 2
          %s159 = scalar_select %p158, %s156, 2
          %p160 = scmp.lt.s32.totalorder %s157, 1
          %s161 = scalar_select %p160, %s157, 1
          %s162 = smul.addr %s159, 2
          %s163 = sadd.s32 %s161, %s162
          %s164 = smul.addr %s163, 4
          %s165 = scalar_lea.vmem %s0, %s164
          %s166 = smul.u32 3, %s19
          %s167 = smul.u32 2, %s21
        $region16: #{generator_forward.3} parent=11 // pred_fallthru
          _
      $region12: #{generator_forward.3} parent=5 // pred_fallthru
        _
      %p168 = scmp.lt.s32.totalorder %s9, 3
      // Predicated region
      $region17: #{generator_forward.3} parent=5 // pred_check
        %p169 = pneg %p168
      $region18: #{generator_forward.3} parent=5 // pred_check_branch
        %171 = sbr.rel (%p169) target = $region20
      $region19: #{generator_forward.3} parent=5 // pred_region
        // Predicated region
        $region21: #{generator_forward.3} parent=19 // pred_check
          %p172 = pneg %p78
        $region22: #{generator_forward.3} parent=19 // pred_check_branch
          %174 = sbr.rel (%p172) target = $region24
        $region23: #{generator_forward.3} parent=19 // pred_region
          %s175 = sand.u32 %s68, 1
          %s176 = sand.u32 %s68, 1
          %s177 = smul.addr %s176, 128
          %s178 = scalar_lea.vmem [#allocation3], %s177
          %s179 = smul.u32 32, %s18
          %s180 = smul.addr %s179, 3
          %s181 = sadd.s32 %s17, %s180
          %s182 = smul.addr %s181, 4
          %s183 = scalar_lea.vmem %s1, %s182
          // Predicated region
          $region25: #{generator_forward.3} parent=23 // pred_check
            _
          $region26: #{generator_forward.3} parent=23 // pred_check_branch
            %185 = sbr.rel (0) target = $region28
          $region27: #{generator_forward.3} parent=23 // pred_region
            // Predicated region
            $region29: #{generator_forward.3} parent=27 // pred_check
              _
            $region30: #{generator_forward.3} parent=27 // pred_check_branch
              %187 = sbr.rel target = $region32
            $region31: #{generator_forward.3} parent=27 // pred_region
              // Predicated region
              $region44: #{generator_forward.3} parent=31 // pred_check
                _
              $region45: #{generator_forward.3} parent=31 // pred_check_branch
                %264 = sbr.rel (0) target = $region47
              $region46: #{generator_forward.3} parent=31 // pred_region
                loop: start=0, step=1, limit=1
                $region48: #{generator_forward.3} parent=46 // loop_pre_header
                  _
                $region49: #{generator_forward.3} parent=46 // loop_header
                  %s266 = sphi 0, %s270
                  %p267 = scmp.ge.s32.totalorder %s266, 1
                  %s271 = sphi %s183, %s183
                  %s272 = sphi %s178, %s178
                $region50: #{generator_forward.3} parent=46 // loop_header_branch
                  %269 = sbr.rel (%p267) target = $region54
                $region51: #{generator_forward.3} parent=46 // loop_body
                  _
                $region52: #{generator_forward.3} parent=46 // loop_footer
                  %s270 = sadd.s32 1, %s266
                $region53: #{generator_forward.3} parent=46 // loop_footer_branch
                  %265 = sbr.rel target = $region49
                $region54: #{generator_forward.3} parent=46 // loop_exit
                  _
                loop: start=0, step=1, limit=1
                $region55: #{generator_forward.3} parent=46 // loop_pre_header
                  _
                $region56: #{generator_forward.3} parent=46 // loop_header
                  %s275 = sphi 0, %s279
                  %p276 = scmp.ge.s32.totalorder %s275, 1
                  %s280 = sphi %s183, %s183
                  %s281 = sphi %s178, %s178
                $region57: #{generator_forward.3} parent=46 // loop_header_branch
                  %278 = sbr.rel (%p276) target = $region61
                $region58: #{generator_forward.3} parent=46 // loop_body
                  %v282 = vld [vmem:[%s280] sm:$0xf]
                  %283 = vst [vmem:[%s281] sm:$0xf] %v282
                  %v284 = vld [vmem:[%s280 + $0xc] sm:$0xf]
                  %285 = vst [vmem:[%s281 + $0x4] sm:$0xf] %v284
                  %v286 = vld [vmem:[%s280 + $0x18] sm:$0xf]
                  %287 = vst [vmem:[%s281 + $0x8] sm:$0xf] %v286
                  %v288 = vld [vmem:[%s280 + $0x24] sm:$0xf]
                  %289 = vst [vmem:[%s281 + $0xc] sm:$0xf] %v288
                  %v290 = vld [vmem:[%s280 + $0x30] sm:$0xf]
                  %291 = vst [vmem:[%s281 + $0x10] sm:$0xf] %v290
                  %v292 = vld [vmem:[%s280 + $0x3c] sm:$0xf]
                  %293 = vst [vmem:[%s281 + $0x14] sm:$0xf] %v292
                  %v294 = vld [vmem:[%s280 + $0x48] sm:$0xf]
                  %295 = vst [vmem:[%s281 + $0x18] sm:$0xf] %v294
                  %v296 = vld [vmem:[%s280 + $0x54] sm:$0xf]
                  %297 = vst [vmem:[%s281 + $0x1c] sm:$0xf] %v296
                  %v298 = vld [vmem:[%s280 + $0x60] sm:$0xf]
                  %299 = vst [vmem:[%s281 + $0x20] sm:$0xf] %v298
                  %v300 = vld [vmem:[%s280 + $0x6c] sm:$0xf]
                  %301 = vst [vmem:[%s281 + $0x24] sm:$0xf] %v300
                  %v302 = vld [vmem:[%s280 + $0x78] sm:$0xf]
                  %303 = vst [vmem:[%s281 + $0x28] sm:$0xf] %v302
                  %v304 = vld [vmem:[%s280 + $0x84] sm:$0xf]
                  %305 = vst [vmem:[%s281 + $0x2c] sm:$0xf] %v304
                  %v306 = vld [vmem:[%s280 + $0x90] sm:$0xf]
                  %307 = vst [vmem:[%s281 + $0x30] sm:$0xf] %v306
                  %v308 = vld [vmem:[%s280 + $0x9c] sm:$0xf]
                  %309 = vst [vmem:[%s281 + $0x34] sm:$0xf] %v308
                  %v310 = vld [vmem:[%s280 + $0xa8] sm:$0xf]
                  %311 = vst [vmem:[%s281 + $0x38] sm:$0xf] %v310
                  %v312 = vld [vmem:[%s280 + $0xb4] sm:$0xf]
                  %313 = vst [vmem:[%s281 + $0x3c] sm:$0xf] %v312
                  %v314 = vld [vmem:[%s280 + $0xc0] sm:$0xf]
                  %315 = vst [vmem:[%s281 + $0x40] sm:$0xf] %v314
                  %v316 = vld [vmem:[%s280 + $0xcc] sm:$0xf]
                  %317 = vst [vmem:[%s281 + $0x44] sm:$0xf] %v316
                  %v318 = vld [vmem:[%s280 + $0xd8] sm:$0xf]
                  %319 = vst [vmem:[%s281 + $0x48] sm:$0xf] %v318
                  %v320 = vld [vmem:[%s280 + $0xe4] sm:$0xf]
                  %321 = vst [vmem:[%s281 + $0x4c] sm:$0xf] %v320
                  %v322 = vld [vmem:[%s280 + $0xf0] sm:$0xf]
                  %323 = vst [vmem:[%s281 + $0x50] sm:$0xf] %v322
                  %v324 = vld [vmem:[%s280 + $0xfc] sm:$0xf]
                  %325 = vst [vmem:[%s281 + $0x54] sm:$0xf] %v324
                  %v326 = vld [vmem:[%s280 + $0x108] sm:$0xf]
                  %327 = vst [vmem:[%s281 + $0x58] sm:$0xf] %v326
                  %v328 = vld [vmem:[%s280 + $0x114] sm:$0xf]
                  %329 = vst [vmem:[%s281 + $0x5c] sm:$0xf] %v328
                  %v330 = vld [vmem:[%s280 + $0x120] sm:$0xf]
                  %331 = vst [vmem:[%s281 + $0x60] sm:$0xf] %v330
                  %v332 = vld [vmem:[%s280 + $0x12c] sm:$0xf]
                  %333 = vst [vmem:[%s281 + $0x64] sm:$0xf] %v332
                  %v334 = vld [vmem:[%s280 + $0x138] sm:$0xf]
                  %335 = vst [vmem:[%s281 + $0x68] sm:$0xf] %v334
                  %v336 = vld [vmem:[%s280 + $0x144] sm:$0xf]
                  %337 = vst [vmem:[%s281 + $0x6c] sm:$0xf] %v336
                  %v338 = vld [vmem:[%s280 + $0x150] sm:$0xf]
                  %339 = vst [vmem:[%s281 + $0x70] sm:$0xf] %v338
                  %v340 = vld [vmem:[%s280 + $0x15c] sm:$0xf]
                  %341 = vst [vmem:[%s281 + $0x74] sm:$0xf] %v340
                  %v342 = vld [vmem:[%s280 + $0x168] sm:$0xf]
                  %343 = vst [vmem:[%s281 + $0x78] sm:$0xf] %v342
                  %v344 = vld [vmem:[%s280 + $0x174] sm:$0xf]
                  %345 = vst [vmem:[%s281 + $0x7c] sm:$0xf] %v344
                $region59: #{generator_forward.3} parent=46 // loop_footer
                  %s279 = sadd.s32 1, %s275
                $region60: #{generator_forward.3} parent=46 // loop_footer_branch
                  %274 = sbr.rel target = $region56
                $region61: #{generator_forward.3} parent=46 // loop_exit
                  _
              $region47: #{generator_forward.3} parent=31 // pred_fallthru
                _
            $region32: #{generator_forward.3} parent=27 // pred_fallthru
              _
            // Predicated region
            $region33: #{generator_forward.3} parent=27 // pred_check
              _
            $region34: #{generator_forward.3} parent=27 // pred_check_branch
              %189 = sbr.rel (0) target = $region36
            $region35: #{generator_forward.3} parent=27 // pred_region
              loop: start=0, step=1, limit=1
              $region37: #{generator_forward.3} parent=35 // loop_pre_header
                _
              $region38: #{generator_forward.3} parent=35 // loop_header
                %s192 = sphi 0, %s196
                %p193 = scmp.ge.s32.totalorder %s192, 1
                %s197 = sphi %s183, %s183
                %s198 = sphi %s178, %s178
              $region39: #{generator_forward.3} parent=35 // loop_header_branch
                %195 = sbr.rel (%p193) target = $region43
              $region40: #{generator_forward.3} parent=35 // loop_body
                %v199 = vld [vmem:[%s197] sm:$0xf]
                %200 = vst [vmem:[%s198] sm:$0xf] %v199
                %v201 = vld [vmem:[%s197 + $0xc] sm:$0xf]
                %202 = vst [vmem:[%s198 + $0x4] sm:$0xf] %v201
                %v203 = vld [vmem:[%s197 + $0x18] sm:$0xf]
                %204 = vst [vmem:[%s198 + $0x8] sm:$0xf] %v203
                %v205 = vld [vmem:[%s197 + $0x24] sm:$0xf]
                %206 = vst [vmem:[%s198 + $0xc] sm:$0xf] %v205
                %v207 = vld [vmem:[%s197 + $0x30] sm:$0xf]
                %208 = vst [vmem:[%s198 + $0x10] sm:$0xf] %v207
                %v209 = vld [vmem:[%s197 + $0x3c] sm:$0xf]
                %210 = vst [vmem:[%s198 + $0x14] sm:$0xf] %v209
                %v211 = vld [vmem:[%s197 + $0x48] sm:$0xf]
                %212 = vst [vmem:[%s198 + $0x18] sm:$0xf] %v211
                %v213 = vld [vmem:[%s197 + $0x54] sm:$0xf]
                %214 = vst [vmem:[%s198 + $0x1c] sm:$0xf] %v213
                %v215 = vld [vmem:[%s197 + $0x60] sm:$0xf]
                %216 = vst [vmem:[%s198 + $0x20] sm:$0xf] %v215
                %v217 = vld [vmem:[%s197 + $0x6c] sm:$0xf]
                %218 = vst [vmem:[%s198 + $0x24] sm:$0xf] %v217
                %v219 = vld [vmem:[%s197 + $0x78] sm:$0xf]
                %220 = vst [vmem:[%s198 + $0x28] sm:$0xf] %v219
                %v221 = vld [vmem:[%s197 + $0x84] sm:$0xf]
                %222 = vst [vmem:[%s198 + $0x2c] sm:$0xf] %v221
                %v223 = vld [vmem:[%s197 + $0x90] sm:$0xf]
                %224 = vst [vmem:[%s198 + $0x30] sm:$0xf] %v223
                %v225 = vld [vmem:[%s197 + $0x9c] sm:$0xf]
                %226 = vst [vmem:[%s198 + $0x34] sm:$0xf] %v225
                %v227 = vld [vmem:[%s197 + $0xa8] sm:$0xf]
                %228 = vst [vmem:[%s198 + $0x38] sm:$0xf] %v227
                %v229 = vld [vmem:[%s197 + $0xb4] sm:$0xf]
                %230 = vst [vmem:[%s198 + $0x3c] sm:$0xf] %v229
                %v231 = vld [vmem:[%s197 + $0xc0] sm:$0xf]
                %232 = vst [vmem:[%s198 + $0x40] sm:$0xf] %v231
                %v233 = vld [vmem:[%s197 + $0xcc] sm:$0xf]
                %234 = vst [vmem:[%s198 + $0x44] sm:$0xf] %v233
                %v235 = vld [vmem:[%s197 + $0xd8] sm:$0xf]
                %236 = vst [vmem:[%s198 + $0x48] sm:$0xf] %v235
                %v237 = vld [vmem:[%s197 + $0xe4] sm:$0xf]
                %238 = vst [vmem:[%s198 + $0x4c] sm:$0xf] %v237
                %v239 = vld [vmem:[%s197 + $0xf0] sm:$0xf]
                %240 = vst [vmem:[%s198 + $0x50] sm:$0xf] %v239
                %v241 = vld [vmem:[%s197 + $0xfc] sm:$0xf]
                %242 = vst [vmem:[%s198 + $0x54] sm:$0xf] %v241
                %v243 = vld [vmem:[%s197 + $0x108] sm:$0xf]
                %244 = vst [vmem:[%s198 + $0x58] sm:$0xf] %v243
                %v245 = vld [vmem:[%s197 + $0x114] sm:$0xf]
                %246 = vst [vmem:[%s198 + $0x5c] sm:$0xf] %v245
                %v247 = vld [vmem:[%s197 + $0x120] sm:$0xf]
                %248 = vst [vmem:[%s198 + $0x60] sm:$0xf] %v247
                %v249 = vld [vmem:[%s197 + $0x12c] sm:$0xf]
                %250 = vst [vmem:[%s198 + $0x64] sm:$0xf] %v249
                %v251 = vld [vmem:[%s197 + $0x138] sm:$0xf]
                %252 = vst [vmem:[%s198 + $0x68] sm:$0xf] %v251
                %v253 = vld [vmem:[%s197 + $0x144] sm:$0xf]
                %254 = vst [vmem:[%s198 + $0x6c] sm:$0xf] %v253
                %v255 = vld [vmem:[%s197 + $0x150] sm:$0xf]
                %256 = vst [vmem:[%s198 + $0x70] sm:$0xf] %v255
                %v257 = vld [vmem:[%s197 + $0x15c] sm:$0xf]
                %258 = vst [vmem:[%s198 + $0x74] sm:$0xf] %v257
                %v259 = vld [vmem:[%s197 + $0x168] sm:$0xf]
                %260 = vst [vmem:[%s198 + $0x78] sm:$0xf] %v259
                %v261 = vld [vmem:[%s197 + $0x174] sm:$0xf]
                %262 = vst [vmem:[%s198 + $0x7c] sm:$0xf] %v261
              $region41: #{generator_forward.3} parent=35 // loop_footer
                %s196 = sadd.s32 1, %s192
              $region42: #{generator_forward.3} parent=35 // loop_footer_branch
                %191 = sbr.rel target = $region38
              $region43: #{generator_forward.3} parent=35 // loop_exit
                _
            $region36: #{generator_forward.3} parent=27 // pred_fallthru
              _
          $region28: #{generator_forward.3} parent=23 // pred_fallthru
            _
          %346 = vnop
        $region24: #{generator_forward.3} parent=19 // pred_fallthru
          _
        // Predicated region
        $region62: #{generator_forward.3} parent=19 // pred_check
          %p347 = pneg %p104
        $region63: #{generator_forward.3} parent=19 // pred_check_branch
          %349 = sbr.rel (%p347) target = $region65
        $region64: #{generator_forward.3} parent=19 // pred_region
          %p350 = scmp.lt.s32.totalorder %s17, 2
          %s351 = scalar_select %p350, %s17, 2
          %s352 = scalar_lea.vmem %s2, %s351
        $region65: #{generator_forward.3} parent=19 // pred_fallthru
          _
      $region20: #{generator_forward.3} parent=5 // pred_fallthru
        _
      %p353 = scmp.le.s32.totalorder 1, %s9
      %p354 = scmp.lt.s32.totalorder %s9, 4
      %p355 = pnand %p353, %p354
      %p356 = pneg %p355
      // Predicated region
      $region66: #{generator_forward.3} parent=5 // pred_check
        _
      $region67: #{generator_forward.3} parent=5 // pred_check_branch
        %358 = sbr.rel (%p355) target = $region69
      $region68: #{generator_forward.3} parent=5 // pred_region
        %s359 = ssub.s32 %s9, 1
        %s360 = sand.u32 %s71, 1
        %s361 = sand.u32 %s71, 1
        %s362 = smul.addr %s361, 128
        %s363 = scalar_lea.vmem [#allocation3], %s362
        // Predicated region
        $region70: #{generator_forward.3} parent=68 // pred_check
          %p364 = pneg %p84
        $region71: #{generator_forward.3} parent=68 // pred_check_branch
          %366 = sbr.rel (%p364) target = $region73
        $region72: #{generator_forward.3} parent=68 // pred_region
          _
        $region73: #{generator_forward.3} parent=68 // pred_fallthru
          _
        %s367 = smul.u32 3, %s19
        %s368 = smul.u32 2, %s21
        %p369 = scmp.lt.s32.totalorder %s367, 2
        %s370 = scalar_select %p369, %s367, 2
        %p371 = scmp.lt.s32.totalorder %s368, 1
        %s372 = scalar_select %p371, %s368, 1
        %s373 = smul.addr %s370, 2
        %s374 = sadd.s32 %s372, %s373
        %s375 = smul.addr %s374, 4
        %s376 = scalar_lea.vmem %s0, %s375
        %p377 = pneg %p56
        %p378 = pneg %p53
        %s379 = sand.u32 %s71, 1
        %s380 = sand.u32 %s71, 1
        %s381 = smul.addr %s380, 128
        %s382 = scalar_lea.vmem [#allocation3], %s381
        %p383 = pneg %p84
        %p384 = pneg %p81
        %p385 = scmp.lt.s32.totalorder %s20, 2
        %s386 = scalar_select %p385, %s20, 2
        %s387 = scalar_lea.vmem %s2, %s386
        %p388 = pneg %p110
        %p389 = pneg %p107
        %p390 = pneg %p138
        %p391 = pneg %p135
        %s392 = sand.u32 %s125, 1
        %s393 = sand.u32 %s125, 1
        %s394 = smul.addr %s393, 12
        %s395 = scalar_lea.vmem [#allocation4], %s394
        %s396 = smul.u32 3, %s19
        %s397 = smul.u32 2, %s21
        %p398 = scmp.lt.s32.totalorder %s396, 2
        %s399 = scalar_select %p398, %s396, 2
        %p400 = scmp.lt.s32.totalorder %s397, 1
        %s401 = scalar_select %p400, %s397, 1
        %s402 = smul.addr %s399, 2
        %s403 = sadd.s32 %s401, %s402
        %s404 = smul.addr %s403, 4
        %s405 = scalar_lea.vmem %s0, %s404
        %s406 = smul.u32 3, %s19
        %s407 = smul.u32 2, %s21
        %s408 = smul.u32 32, %s21
        %p409 = scmp.lt.s32.totalorder %s20, 2
        %s410 = scalar_select %p409, %s20, 2
        %s411 = scalar_lea.vmem %s2, %s410
        %s412 = smul.u32 3, %s19
        %p414 = scmp.eq.s32.totalorder %s21, 0
        // Predicated region
        $region74: #{generator_forward.3} parent=68 // pred_check
          %p415 = pneg %p414
        $region75: #{generator_forward.3} parent=68 // pred_check_branch
          %417 = sbr.rel (%p415) target = $region77
        $region76: #{generator_forward.3} parent=68 // pred_region
          %418 = vst [vmem:[#allocation2] sm:$0xff] 0.0
          %419 = vst [vmem:[#allocation2 + $0x8] sm:$0xff] 0.0
          %420 = vst [vmem:[#allocation2 + $0x10] sm:$0xff] 0.0
        $region77: #{generator_forward.3} parent=68 // pred_fallthru
          _
        %v421 = vld [vmem:[#allocation2] sm:$0xff]
        %v422 = vld [vmem:[#allocation2 + $0x8] sm:$0xff]
        %v423 = vld [vmem:[#allocation2 + $0x10] sm:$0xff]
        %v424 = vld [vmem:[%s405] sm:$0xff]
        %v425 = vld [vmem:[%s405 + $0x8] sm:$0xff]
        %v426 = vld [vmem:[%s405 + $0x10] sm:$0xff]
        %v427 = vld [vmem:[%s363] sm:$0xf]
        %v428 = vld [vmem:[%s363 + $0x4] sm:$0xf]
        %v429 = vld [vmem:[%s363 + $0x8] sm:$0xf]
        %v430 = vld [vmem:[%s363 + $0xc] sm:$0xf]
        %v431 = vld [vmem:[%s363 + $0x10] sm:$0xf]
        %v432 = vld [vmem:[%s363 + $0x14] sm:$0xf]
        %v433 = vld [vmem:[%s363 + $0x18] sm:$0xf]
        %v434 = vld [vmem:[%s363 + $0x1c] sm:$0xf]
        %v435 = vld [vmem:[%s363 + $0x20] sm:$0xf]
        %v436 = vld [vmem:[%s363 + $0x24] sm:$0xf]
        %v437 = vld [vmem:[%s363 + $0x28] sm:$0xf]
        %v438 = vld [vmem:[%s363 + $0x2c] sm:$0xf]
        %v439 = vld [vmem:[%s363 + $0x30] sm:$0xf]
        %v440 = vld [vmem:[%s363 + $0x34] sm:$0xf]
        %v441 = vld [vmem:[%s363 + $0x38] sm:$0xf]
        %v442 = vld [vmem:[%s363 + $0x3c] sm:$0xf]
        %v443 = vld [vmem:[%s363 + $0x40] sm:$0xf]
        %v444 = vld [vmem:[%s363 + $0x44] sm:$0xf]
        %v445 = vld [vmem:[%s363 + $0x48] sm:$0xf]
        %v446 = vld [vmem:[%s363 + $0x4c] sm:$0xf]
        %v447 = vld [vmem:[%s363 + $0x50] sm:$0xf]
        %v448 = vld [vmem:[%s363 + $0x54] sm:$0xf]
        %v449 = vld [vmem:[%s363 + $0x58] sm:$0xf]
        %v450 = vld [vmem:[%s363 + $0x5c] sm:$0xf]
        %v451 = vld [vmem:[%s363 + $0x60] sm:$0xf]
        %v452 = vld [vmem:[%s363 + $0x64] sm:$0xf]
        %v453 = vld [vmem:[%s363 + $0x68] sm:$0xf]
        %v454 = vld [vmem:[%s363 + $0x6c] sm:$0xf]
        %v455 = vld [vmem:[%s363 + $0x70] sm:$0xf]
        %v456 = vld [vmem:[%s363 + $0x74] sm:$0xf]
        %v457 = vld [vmem:[%s363 + $0x78] sm:$0xf]
        %v458 = vld [vmem:[%s363 + $0x7c] sm:$0xf]
        %v462 = vunpack.c.l.b16 %v424
        %v463 = vunpack.c.h.b16 %v424
        %v464 = vunpack.c.l.b16 %v425
        %v465 = vunpack.c.h.b16 %v425
        %v466 = vunpack.c.l.b16 %v426
        %v467 = vunpack.c.h.b16 %v426
        %v468 = vpack.c.b16 %v464, %v462
        %v469 = vpack.c.b16 %v465, %v463
        %v470 = vpack.c.b16 %v466, %v466
        %v471 = vpack.c.b16 %v467, %v467
        %v508 = vunpack.c.l.b16 %v427
        %v509 = vunpack.c.l.b16 %v428
        %v510 = vunpack.c.l.b16 %v429
        %v511 = vunpack.c.l.b16 %v430
        %v512 = vunpack.c.l.b16 %v431
        %v513 = vunpack.c.l.b16 %v432
        %v514 = vunpack.c.l.b16 %v433
        %v515 = vunpack.c.l.b16 %v434
        %v516 = vunpack.c.l.b16 %v435
        %v517 = vunpack.c.l.b16 %v436
        %v518 = vunpack.c.l.b16 %v437
        %v519 = vunpack.c.l.b16 %v438
        %v520 = vunpack.c.l.b16 %v439
        %v521 = vunpack.c.l.b16 %v440
        %v522 = vunpack.c.l.b16 %v441
        %v523 = vunpack.c.l.b16 %v442
        %v524 = vunpack.c.l.b16 %v443
        %v525 = vunpack.c.l.b16 %v444
        %v526 = vunpack.c.l.b16 %v445
        %v527 = vunpack.c.l.b16 %v446
        %v528 = vunpack.c.l.b16 %v447
        %v529 = vunpack.c.l.b16 %v448
        %v530 = vunpack.c.l.b16 %v449
        %v531 = vunpack.c.l.b16 %v450
        %v532 = vunpack.c.l.b16 %v451
        %v533 = vunpack.c.l.b16 %v452
        %v534 = vunpack.c.l.b16 %v453
        %v535 = vunpack.c.l.b16 %v454
        %v536 = vunpack.c.l.b16 %v455
        %v537 = vunpack.c.l.b16 %v456
        %v538 = vunpack.c.l.b16 %v457
        %v539 = vunpack.c.l.b16 %v458
        %v540 = vpack.c.b16 %v509, %v508
        %v541 = vpack.c.b16 %v511, %v510
        %v542 = vpack.c.b16 %v513, %v512
        %v543 = vpack.c.b16 %v515, %v514
        %v544 = vpack.c.b16 %v517, %v516
        %v545 = vpack.c.b16 %v519, %v518
        %v546 = vpack.c.b16 %v521, %v520
        %v547 = vpack.c.b16 %v523, %v522
        %v548 = vpack.c.b16 %v525, %v524
        %v549 = vpack.c.b16 %v527, %v526
        %v550 = vpack.c.b16 %v529, %v528
        %v551 = vpack.c.b16 %v531, %v530
        %v552 = vpack.c.b16 %v533, %v532
        %v553 = vpack.c.b16 %v535, %v534
        %v554 = vpack.c.b16 %v537, %v536
        %v555 = vpack.c.b16 %v539, %v538
        %572 = vmatprep.subr.bf16.mxu0 0
        %573 = vmatpush1.bf16.msra.mxu0 %v540
        %574 = vmatprep.subr.bf16.mxu0 0
        %575 = vmatpush1.bf16.msra.mxu0 %v541
        %576 = vmatprep.subr.bf16.mxu0 0
        %577 = vmatpush1.bf16.msra.mxu0 %v542
        %578 = vmatprep.subr.bf16.mxu0 0
        %579 = vmatpush1.bf16.msra.mxu0 %v543
        %580 = vmatprep.subr.bf16.mxu0 0
        %581 = vmatpush1.bf16.msra.mxu0 %v544
        %582 = vmatprep.subr.bf16.mxu0 0
        %583 = vmatpush1.bf16.msra.mxu0 %v545
        %584 = vmatprep.subr.bf16.mxu0 0
        %585 = vmatpush1.bf16.msra.mxu0 %v546
        %586 = vmatprep.subr.bf16.mxu0 0
        %587 = vmatpush1.bf16.msra.mxu0 %v547
        %588 = vmatprep.subr.bf16.mxu0 0
        %589 = vmatpush1.bf16.msra.mxu0 %v548
        %590 = vmatprep.subr.bf16.mxu0 0
        %591 = vmatpush1.bf16.msra.mxu0 %v549
        %592 = vmatprep.subr.bf16.mxu0 0
        %593 = vmatpush1.bf16.msra.mxu0 %v550
        %594 = vmatprep.subr.bf16.mxu0 0
        %595 = vmatpush1.bf16.msra.mxu0 %v551
        %596 = vmatprep.subr.bf16.mxu0 0
        %597 = vmatpush1.bf16.msra.mxu0 %v552
        %598 = vmatprep.subr.bf16.mxu0 0
        %599 = vmatpush1.bf16.msra.mxu0 %v553
        %600 = vmatprep.subr.bf16.mxu0 0
        %601 = vmatpush1.bf16.msra.mxu0 %v554
        %602 = vmatprep.subr.bf16.mxu0 0
        %603 = vmatpush1.bf16.msra.mxu0 %v555
        %604 = vmatprep.mubr.bf16.mxu0 %v469
        %605 = vmatmul.mubr.bf16.gmra.mrb[0].mxu0 %v468
        %v606 = vpop.f32.mrb[0].mxu0
        %v607 = vadd.f32 0.0, %v606
        %v608 = vpop.f32.mrb[0].mxu0
        %v609 = vpop.f32.mrb[0].mxu0
        %v610 = vadd.f32 0.0, %v609
        %v611 = vpop.f32.mrb[0].mxu0
        %612 = vmatprep.mubr.bf16.mxu0 %v471
        %613 = vmatmul.mubr.bf16.gmra.mrb[0].mxu0 %v470
        %v614 = vpop.f32.mrb[0].mxu0
        %v615 = vadd.f32 0.0, %v614
        %v616 = vpop.f32.mrb[0].mxu0
        %v617 = vpop.f32.mrb[0].mxu0
        %v618 = vpop.f32.mrb[0].mxu0
        %619 = vdwg.mxu0
        %v620 = vadd.f32 %v421, %v607
        %v621 = vadd.f32 %v422, %v610
        %v622 = vadd.f32 %v423, %v615
        %623 = vst [vmem:[#allocation2] sm:$0xff] %v620
        %624 = vst [vmem:[#allocation2 + $0x8] sm:$0xff] %v621
        %625 = vst [vmem:[#allocation2 + $0x10] sm:$0xff] %v622
        // Predicated region
        $region78: #{generator_forward.3} parent=68 // pred_check
          %p626 = pneg %p414
        $region79: #{generator_forward.3} parent=68 // pred_check_branch
          %628 = sbr.rel (%p626) target = $region81
        $region80: #{generator_forward.3} parent=68 // pred_region
          %v629 = vld [vmem:[#allocation2] sm:$0xff]
          %v630 = vld [vmem:[#allocation2 + $0x8] sm:$0xff]
          %v631 = vld [vmem:[#allocation2 + $0x10] sm:$0xff]
          %v632 = vld [vmem:[%s411] sm:$0x1]
          %v634 = vlaneseq
          %v635 = vshrl.u32 %v634, 7
          %v636 = vsub.s32 0, %v635
          %v637 = vrot.slane %v632, %v636
          %v639 = vadd.f32 %v629, %v637
          %v640 = vadd.f32 %v630, %v637
          %v641 = vadd.f32 %v631, %v637
          %v642 = vmax.f32 %v639, 0.0
          %v643 = vmax.f32 %v640, 0.0
          %v644 = vmax.f32 %v641, 0.0
          %v645 = vpack.c.bf16 %v643, %v642
          %v646 = vpack.c.bf16 %v644, %v644
          %v649 = vunpack.c.l.b16 %v645
          %v650 = vunpack.c.h.b16 %v645
          %v651 = vunpack.c.l.b16 %v646
          %v652 = vpack.c.b16 %v649, %v649
          %v653 = vpack.c.b16 %v650, %v650
          %v654 = vpack.c.b16 %v651, %v651
          %658 = vst [vmem:[%s395] sm:$0xf] %v652
          %659 = vst [vmem:[%s395 + $0x4] sm:$0xf] %v653
          %660 = vst [vmem:[%s395 + $0x8] sm:$0xf] %v654
        $region81: #{generator_forward.3} parent=68 // pred_fallthru
          _
        %s661 = sand.u32 %s125, 1
        %s662 = sand.u32 %s125, 1
        %s663 = smul.addr %s662, 12
        %s664 = scalar_lea.vmem [#allocation4], %s663
        // Predicated region
        $region82: #{generator_forward.3} parent=68 // pred_check
          %p665 = pneg %p135
        $region83: #{generator_forward.3} parent=68 // pred_check_branch
          %667 = sbr.rel (%p665) target = $region85
        $region84: #{generator_forward.3} parent=68 // pred_region
          %s668 = smul.u32 3, %s19
          %s669 = smul.addr %s668, 3
          %s670 = sadd.s32 %s20, %s669
          %s671 = smul.addr %s670, 4
          %s672 = scalar_lea.vmem %s3, %s671
          // Predicated region
          $region86: #{generator_forward.3} parent=84 // pred_check
            _
          $region87: #{generator_forward.3} parent=84 // pred_check_branch
            %674 = sbr.rel (0) target = $region89
          $region88: #{generator_forward.3} parent=84 // pred_region
            // Predicated region
            $region90: #{generator_forward.3} parent=88 // pred_check
              _
            $region91: #{generator_forward.3} parent=88 // pred_check_branch
              %676 = sbr.rel target = $region93
            $region92: #{generator_forward.3} parent=88 // pred_region
              // Predicated region
              $region105: #{generator_forward.3} parent=92 // pred_check
                _
              $region106: #{generator_forward.3} parent=92 // pred_check_branch
                %695 = sbr.rel (0) target = $region108
              $region107: #{generator_forward.3} parent=92 // pred_region
                loop: start=0, step=1, limit=1
                $region109: #{generator_forward.3} parent=107 // loop_pre_header
                  _
                $region110: #{generator_forward.3} parent=107 // loop_header
                  %s697 = sphi 0, %s701
                  %p698 = scmp.ge.s32.totalorder %s697, 1
                  %s702 = sphi %s664, %s664
                  %s703 = sphi %s672, %s672
                $region111: #{generator_forward.3} parent=107 // loop_header_branch
                  %700 = sbr.rel (%p698) target = $region115
                $region112: #{generator_forward.3} parent=107 // loop_body
                  _
                $region113: #{generator_forward.3} parent=107 // loop_footer
                  %s701 = sadd.s32 1, %s697
                $region114: #{generator_forward.3} parent=107 // loop_footer_branch
                  %696 = sbr.rel target = $region110
                $region115: #{generator_forward.3} parent=107 // loop_exit
                  _
                loop: start=0, step=1, limit=1
                $region116: #{generator_forward.3} parent=107 // loop_pre_header
                  _
                $region117: #{generator_forward.3} parent=107 // loop_header
                  %s706 = sphi 0, %s710
                  %p707 = scmp.ge.s32.totalorder %s706, 1
                  %s711 = sphi %s664, %s664
                  %s712 = sphi %s672, %s672
                $region118: #{generator_forward.3} parent=107 // loop_header_branch
                  %709 = sbr.rel (%p707) target = $region122
                $region119: #{generator_forward.3} parent=107 // loop_body
                  %v713 = vld [vmem:[%s711] sm:$0xf]
                  %714 = vst [vmem:[%s712] sm:$0xf] %v713
                  %v715 = vld [vmem:[%s711 + $0x4] sm:$0xf]
                  %716 = vst [vmem:[%s712 + $0xc] sm:$0xf] %v715
                  %v717 = vld [vmem:[%s711 + $0x8] sm:$0xf]
                  %718 = vst [vmem:[%s712 + $0x18] sm:$0xf] %v717
                $region120: #{generator_forward.3} parent=107 // loop_footer
                  %s710 = sadd.s32 1, %s706
                $region121: #{generator_forward.3} parent=107 // loop_footer_branch
                  %705 = sbr.rel target = $region117
                $region122: #{generator_forward.3} parent=107 // loop_exit
                  _
              $region108: #{generator_forward.3} parent=92 // pred_fallthru
                _
            $region93: #{generator_forward.3} parent=88 // pred_fallthru
              _
            // Predicated region
            $region94: #{generator_forward.3} parent=88 // pred_check
              _
            $region95: #{generator_forward.3} parent=88 // pred_check_branch
              %678 = sbr.rel (0) target = $region97
            $region96: #{generator_forward.3} parent=88 // pred_region
              loop: start=0, step=1, limit=1
              $region98: #{generator_forward.3} parent=96 // loop_pre_header
                _
              $region99: #{generator_forward.3} parent=96 // loop_header
                %s681 = sphi 0, %s685
                %p682 = scmp.ge.s32.totalorder %s681, 1
                %s686 = sphi %s664, %s664
                %s687 = sphi %s672, %s672
              $region100: #{generator_forward.3} parent=96 // loop_header_branch
                %684 = sbr.rel (%p682) target = $region104
              $region101: #{generator_forward.3} parent=96 // loop_body
                %v688 = vld [vmem:[%s686] sm:$0xf]
                %689 = vst [vmem:[%s687] sm:$0xf] %v688
                %v690 = vld [vmem:[%s686 + $0x4] sm:$0xf]
                %691 = vst [vmem:[%s687 + $0xc] sm:$0xf] %v690
                %v692 = vld [vmem:[%s686 + $0x8] sm:$0xf]
                %693 = vst [vmem:[%s687 + $0x18] sm:$0xf] %v692
              $region102: #{generator_forward.3} parent=96 // loop_footer
                %s685 = sadd.s32 1, %s681
              $region103: #{generator_forward.3} parent=96 // loop_footer_branch
                %680 = sbr.rel target = $region99
              $region104: #{generator_forward.3} parent=96 // loop_exit
                _
            $region97: #{generator_forward.3} parent=88 // pred_fallthru
              _
          $region89: #{generator_forward.3} parent=84 // pred_fallthru
            _
          %719 = vnop
        $region85: #{generator_forward.3} parent=68 // pred_fallthru
          _
      $region69: #{generator_forward.3} parent=5 // pred_fallthru
        _
      %p720 = scmp.le.s32.totalorder 2, %s9
      // Predicated region
      $region123: #{generator_forward.3} parent=5 // pred_check
        %p721 = pneg %p720
      $region124: #{generator_forward.3} parent=5 // pred_check_branch
        %723 = sbr.rel (%p721) target = $region126
      $region125: #{generator_forward.3} parent=5 // pred_region
        %s724 = ssub.s32 %s9, 2
        // Predicated region
        $region127: #{generator_forward.3} parent=125 // pred_check
          %p725 = pneg %p141
        $region128: #{generator_forward.3} parent=125 // pred_check_branch
          %727 = sbr.rel (%p725) target = $region130
        $region129: #{generator_forward.3} parent=125 // pred_region
          %s728 = sand.u32 %s126, 1
          %s729 = sand.u32 %s126, 1
          %s730 = smul.addr %s729, 12
          %s731 = scalar_lea.vmem [#allocation4], %s730
        $region130: #{generator_forward.3} parent=125 // pred_fallthru
          _
      $region126: #{generator_forward.3} parent=5 // pred_fallthru
        _
    $region6: #{generator_forward.3} parent=1 // loop_footer
      %s13 = sadd.s32 1, %s9
    $region7: #{generator_forward.3} parent=1 // loop_footer_branch
      %8 = sbr.rel target = $region3
    $region8: #{generator_forward.3} parent=1 // loop_exit
      _

// kernel: generator_forward.4
$region0: #{generator_forward.4}
  #allocation0 [shape = 'u32[]', space=smem, size = 0x4, offset = 0x4, fixed_abs, tag = 'smem constant byte address 0x4 - core index']
  #allocation1 [shape = 'u32[144,128]{1,0:T(1,128)}', space=vmem, size = 0x12000, scoped, tag = 'internal scratch']
  #allocation2 [shape = 'f32[24,128]{1,0:T(8,128)}', space=vmem, size = 0x3000, scoped, tag = 'scratch operand']
  %s0 = inlined_call_operand.vmem [shape: bf16[24,384], index: 0, kind: input, shape index: {}]
  %s1 = inlined_call_operand.vmem [shape: bf16[384,384], index: 1, kind: input, shape index: {}]
  %s2 = inlined_call_operand.vmem [shape: f32[1,384], index: 2, kind: input, shape index: {}]
  %s3 = inlined_call_operand.vmem [shape: bf16[24,384], index: 3, kind: output, shape index: {}]
  %s4 = sld [smem:[#allocation0]]
  $region131: #{generator_forward.4} parent=0
    _
  %s6 = ssub.s32 1, %s4
  %s7 = scalar_select 0, %s6, %s4
  $region1: #{generator_forward.4} parent=0
    #allocation3 [shape = 'u8[196608]{0}', space=vmem, size = 0x30000, scoped, tag = 'input window, operand 1']
    #allocation4 [shape = 'u8[12288]{0}', space=vmem, size = 0x3000, scoped, tag = 'output window, operand 0']
    loop: start=0, step=1, limit=5
    $region2: #{generator_forward.4} parent=1 // loop_pre_header
      _
    $region3: #{generator_forward.4} parent=1 // loop_header
      %s9 = sphi 0, %s13
      %p10 = scmp.ge.s32.totalorder %s9, 5
      %s16 = sphi 0, %s35
      %s17 = sphi 0, %s31
      %s18 = sphi 0, %s27
      %s19 = sphi 0, %s16
      %s20 = sphi 0, %s17
      %s21 = sphi 0, %s18
      %s22 = sphi 0, %s19
      %s23 = sphi 0, %s20
      %s24 = sphi 0, %s21
      %s40 = sphi 0, %s42
      %s43 = sphi 0, %s40
      %s44 = sphi 0, %s43
      %s60 = sphi 0, %s44
      %s68 = sphi 0, %s70
      %s71 = sphi 0, %s68
      %s72 = sphi 0, %s71
      %s88 = sphi 0, %s72
      %s94 = sphi 0, %s96
      %s97 = sphi 0, %s94
      %s98 = sphi 0, %s97
      %s114 = sphi 0, %s98
      %s122 = sphi 0, %s124
      %s125 = sphi 0, %s122
      %s126 = sphi 0, %s125
      %s142 = sphi 0, %s126
    $region4: #{generator_forward.4} parent=1 // loop_header_branch
      %12 = sbr.rel (%p10) target = $region8
    $region5: #{generator_forward.4} parent=1 // loop_body
      %s14 = ssub.s32 %s9, 1
      %s15 = ssub.s32 %s9, 2
      %s25 = sadd.s32 1, %s18
      %p26 = scmp.ge.s32.totalorder %s25, 1
      %s27 = scalar_select %p26, 0, %s25
      %s28 = sadd.s32 1, %s17
      %s29 = scalar_select %p26, %s28, %s17
      %p30 = scmp.ge.s32.totalorder %s29, 3
      %s31 = scalar_select %p30, 0, %s29
      %s32 = sadd.s32 1, %s16
      %s33 = scalar_select %p30, %s32, %s16
      %p34 = scmp.ge.s32.totalorder %s33, 1
      %s35 = scalar_select %p34, 0, %s33
      %s36 = ssub.s32 %s16, %s35
      %s37 = ssub.s32 %s18, %s27
      %s38 = sor.u32 %s36, %s37
      %p39 = scmp.eq.s32.totalorder %s38, 0
      %s41 = sadd.s32 %s40, 1
      %s42 = scalar_select %p39, %s40, %s41
      %p45 = pneg %p39
      %p46 = scmp.eq.s32.totalorder %s9, 2
      %p47 = por %p45, %p46
      %p48 = scmp.ne.s32.totalorder %s40, %s43
      %p49 = scmp.eq.s32.totalorder %s9, 0
      %p50 = por %p48, %p49
      %p51 = scmp.ne.s32.totalorder %s40, %s43
      %p52 = scmp.eq.s32.totalorder %s14, 2
      %p53 = por %p51, %p52
      %p54 = scmp.ne.s32.totalorder %s43, %s44
      %p55 = scmp.eq.s32.totalorder %s14, 0
      %p56 = por %p54, %p55
      %p57 = scmp.ne.s32.totalorder %s43, %s44
      %p58 = scmp.eq.s32.totalorder %s15, 2
      %p59 = por %p57, %p58
      %p61 = scmp.ne.s32.totalorder %s44, %s60
      %p62 = scmp.eq.s32.totalorder %s15, 0
      %p63 = por %p61, %p62
      %s64 = ssub.s32 %s18, %s27
      %s65 = ssub.s32 %s17, %s31
      %s66 = sor.u32 %s64, %s65
      %p67 = scmp.eq.s32.totalorder %s66, 0
      %s69 = sadd.s32 %s68, 1
      %s70 = scalar_select %p67, %s68, %s69
      %p73 = pneg %p67
      %p74 = scmp.eq.s32.totalorder %s9, 2
      %p75 = por %p73, %p74
      %p76 = scmp.ne.s32.totalorder %s68, %s71
      %p77 = scmp.eq.s32.totalorder %s9, 0
      %p78 = por %p76, %p77
      %p79 = scmp.ne.s32.totalorder %s68, %s71
      %p80 = scmp.eq.s32.totalorder %s14, 2
      %p81 = por %p79, %p80
      %p82 = scmp.ne.s32.totalorder %s71, %s72
      %p83 = scmp.eq.s32.totalorder %s14, 0
      %p84 = por %p82, %p83
      %p85 = scmp.ne.s32.totalorder %s71, %s72
      %p86 = scmp.eq.s32.totalorder %s15, 2
      %p87 = por %p85, %p86
      %p89 = scmp.ne.s32.totalorder %s72, %s88
      %p90 = scmp.eq.s32.totalorder %s15, 0
      %p91 = por %p89, %p90
      %s92 = ssub.s32 %s17, %s31
      %p93 = scmp.eq.s32.totalorder %s92, 0
      %s95 = sadd.s32 %s94, 1
      %s96 = scalar_select %p93, %s94, %s95
      %p99 = pneg %p93
      %p100 = scmp.eq.s32.totalorder %s9, 2
      %p101 = por %p99, %p100
      %p102 = scmp.ne.s32.totalorder %s94, %s97
      %p103 = scmp.eq.s32.totalorder %s9, 0
      %p104 = por %p102, %p103
      %p105 = scmp.ne.s32.totalorder %s94, %s97
      %p106 = scmp.eq.s32.totalorder %s14, 2
      %p107 = por %p105, %p106
      %p108 = scmp.ne.s32.totalorder %s97, %s98
      %p109 = scmp.eq.s32.totalorder %s14, 0
      %p110 = por %p108, %p109
      %p111 = scmp.ne.s32.totalorder %s97, %s98
      %p112 = scmp.eq.s32.totalorder %s15, 2
      %p113 = por %p111, %p112
      %p115 = scmp.ne.s32.totalorder %s98, %s114
      %p116 = scmp.eq.s32.totalorder %s15, 0
      %p117 = por %p115, %p116
      %s118 = ssub.s32 %s16, %s35
      %s119 = ssub.s32 %s17, %s31
      %s120 = sor.u32 %s118, %s119
      %p121 = scmp.eq.s32.totalorder %s120, 0
      %s123 = sadd.s32 %s122, 1
      %s124 = scalar_select %p121, %s122, %s123
      %p127 = pneg %p121
      %p128 = scmp.eq.s32.totalorder %s9, 2
      %p129 = por %p127, %p128
      %p130 = scmp.ne.s32.totalorder %s122, %s125
      %p131 = scmp.eq.s32.totalorder %s9, 0
      %p132 = por %p130, %p131
      %p133 = scmp.ne.s32.totalorder %s122, %s125
      %p134 = scmp.eq.s32.totalorder %s14, 2
      %p135 = por %p133, %p134
      %p136 = scmp.ne.s32.totalorder %s125, %s126
      %p137 = scmp.eq.s32.totalorder %s14, 0
      %p138 = por %p136, %p137
      %p139 = scmp.ne.s32.totalorder %s125, %s126
      %p140 = scmp.eq.s32.totalorder %s15, 2
      %p141 = por %p139, %p140
      %p143 = scmp.ne.s32.totalorder %s126, %s142
      %p144 = scmp.eq.s32.totalorder %s15, 0
      %p145 = por %p143, %p144
      %p146 = scmp.le.s32.totalorder 1, %s9
      %p147 = scmp.lt.s32.totalorder %s9, 4
      %p148 = pnand %p146, %p147
      %p149 = pneg %p148
      // Predicated region
      $region9: #{generator_forward.4} parent=5 // pred_check
        _
      $region10: #{generator_forward.4} parent=5 // pred_check_branch
        %151 = sbr.rel (%p148) target = $region12
      $region11: #{generator_forward.4} parent=5 // pred_region
        %s152 = ssub.s32 %s9, 1
        // Predicated region
        $region13: #{generator_forward.4} parent=11 // pred_check
          %p153 = pneg %p56
        $region14: #{generator_forward.4} parent=11 // pred_check_branch
          %155 = sbr.rel (%p153) target = $region16
        $region15: #{generator_forward.4} parent=11 // pred_region
          %s156 = smul.u32 3, %s19
          %s157 = smul.u32 3, %s21
          %p158 = scmp.lt.s32.totalorder %s156, 2
          %s159 = scalar_select %p158, %s156, 2
          %p160 = scmp.lt.s32.totalorder %s157, 2
          %s161 = scalar_select %p160, %s157, 2
          %s162 = smul.addr %s159, 3
          %s163 = sadd.s32 %s161, %s162
          %s164 = smul.addr %s163, 4
          %s165 = scalar_lea.vmem %s0, %s164
          %s166 = smul.u32 3, %s19
          %s167 = smul.u32 3, %s21
        $region16: #{generator_forward.4} parent=11 // pred_fallthru
          _
      $region12: #{generator_forward.4} parent=5 // pred_fallthru
        _
      %p168 = scmp.lt.s32.totalorder %s9, 3
      // Predicated region
      $region17: #{generator_forward.4} parent=5 // pred_check
        %p169 = pneg %p168
      $region18: #{generator_forward.4} parent=5 // pred_check_branch
        %171 = sbr.rel (%p169) target = $region20
      $region19: #{generator_forward.4} parent=5 // pred_region
        // Predicated region
        $region21: #{generator_forward.4} parent=19 // pred_check
          %p172 = pneg %p78
        $region22: #{generator_forward.4} parent=19 // pred_check_branch
          %174 = sbr.rel (%p172) target = $region24
        $region23: #{generator_forward.4} parent=19 // pred_region
          %s175 = sand.u32 %s68, 1
          %s176 = sand.u32 %s68, 1
          %s177 = smul.addr %s176, 192
          %s178 = scalar_lea.vmem [#allocation3], %s177
          %s179 = smul.u32 48, %s18
          %s180 = smul.addr %s179, 3
          %s181 = sadd.s32 %s17, %s180
          %s182 = smul.addr %s181, 4
          %s183 = scalar_lea.vmem %s1, %s182
          // Predicated region
          $region25: #{generator_forward.4} parent=23 // pred_check
            _
          $region26: #{generator_forward.4} parent=23 // pred_check_branch
            %185 = sbr.rel (0) target = $region28
          $region27: #{generator_forward.4} parent=23 // pred_region
            // Predicated region
            $region29: #{generator_forward.4} parent=27 // pred_check
              _
            $region30: #{generator_forward.4} parent=27 // pred_check_branch
              %187 = sbr.rel target = $region32
            $region31: #{generator_forward.4} parent=27 // pred_region
              // Predicated region
              $region44: #{generator_forward.4} parent=31 // pred_check
                _
              $region45: #{generator_forward.4} parent=31 // pred_check_branch
                %296 = sbr.rel (0) target = $region47
              $region46: #{generator_forward.4} parent=31 // pred_region
                loop: start=0, step=1, limit=1
                $region48: #{generator_forward.4} parent=46 // loop_pre_header
                  _
                $region49: #{generator_forward.4} parent=46 // loop_header
                  %s298 = sphi 0, %s302
                  %p299 = scmp.ge.s32.totalorder %s298, 1
                  %s303 = sphi %s183, %s183
                  %s304 = sphi %s178, %s178
                $region50: #{generator_forward.4} parent=46 // loop_header_branch
                  %301 = sbr.rel (%p299) target = $region54
                $region51: #{generator_forward.4} parent=46 // loop_body
                  _
                $region52: #{generator_forward.4} parent=46 // loop_footer
                  %s302 = sadd.s32 1, %s298
                $region53: #{generator_forward.4} parent=46 // loop_footer_branch
                  %297 = sbr.rel target = $region49
                $region54: #{generator_forward.4} parent=46 // loop_exit
                  _
                loop: start=0, step=1, limit=1
                $region55: #{generator_forward.4} parent=46 // loop_pre_header
                  _
                $region56: #{generator_forward.4} parent=46 // loop_header
                  %s307 = sphi 0, %s311
                  %p308 = scmp.ge.s32.totalorder %s307, 1
                  %s312 = sphi %s183, %s183
                  %s313 = sphi %s178, %s178
                $region57: #{generator_forward.4} parent=46 // loop_header_branch
                  %310 = sbr.rel (%p308) target = $region61
                $region58: #{generator_forward.4} parent=46 // loop_body
                  %v314 = vld [vmem:[%s312] sm:$0xf]
                  %315 = vst [vmem:[%s313] sm:$0xf] %v314
                  %v316 = vld [vmem:[%s312 + $0xc] sm:$0xf]
                  %317 = vst [vmem:[%s313 + $0x4] sm:$0xf] %v316
                  %v318 = vld [vmem:[%s312 + $0x18] sm:$0xf]
                  %319 = vst [vmem:[%s313 + $0x8] sm:$0xf] %v318
                  %v320 = vld [vmem:[%s312 + $0x24] sm:$0xf]
                  %321 = vst [vmem:[%s313 + $0xc] sm:$0xf] %v320
                  %v322 = vld [vmem:[%s312 + $0x30] sm:$0xf]
                  %323 = vst [vmem:[%s313 + $0x10] sm:$0xf] %v322
                  %v324 = vld [vmem:[%s312 + $0x3c] sm:$0xf]
                  %325 = vst [vmem:[%s313 + $0x14] sm:$0xf] %v324
                  %v326 = vld [vmem:[%s312 + $0x48] sm:$0xf]
                  %327 = vst [vmem:[%s313 + $0x18] sm:$0xf] %v326
                  %v328 = vld [vmem:[%s312 + $0x54] sm:$0xf]
                  %329 = vst [vmem:[%s313 + $0x1c] sm:$0xf] %v328
                  %v330 = vld [vmem:[%s312 + $0x60] sm:$0xf]
                  %331 = vst [vmem:[%s313 + $0x20] sm:$0xf] %v330
                  %v332 = vld [vmem:[%s312 + $0x6c] sm:$0xf]
                  %333 = vst [vmem:[%s313 + $0x24] sm:$0xf] %v332
                  %v334 = vld [vmem:[%s312 + $0x78] sm:$0xf]
                  %335 = vst [vmem:[%s313 + $0x28] sm:$0xf] %v334
                  %v336 = vld [vmem:[%s312 + $0x84] sm:$0xf]
                  %337 = vst [vmem:[%s313 + $0x2c] sm:$0xf] %v336
                  %v338 = vld [vmem:[%s312 + $0x90] sm:$0xf]
                  %339 = vst [vmem:[%s313 + $0x30] sm:$0xf] %v338
                  %v340 = vld [vmem:[%s312 + $0x9c] sm:$0xf]
                  %341 = vst [vmem:[%s313 + $0x34] sm:$0xf] %v340
                  %v342 = vld [vmem:[%s312 + $0xa8] sm:$0xf]
                  %343 = vst [vmem:[%s313 + $0x38] sm:$0xf] %v342
                  %v344 = vld [vmem:[%s312 + $0xb4] sm:$0xf]
                  %345 = vst [vmem:[%s313 + $0x3c] sm:$0xf] %v344
                  %v346 = vld [vmem:[%s312 + $0xc0] sm:$0xf]
                  %347 = vst [vmem:[%s313 + $0x40] sm:$0xf] %v346
                  %v348 = vld [vmem:[%s312 + $0xcc] sm:$0xf]
                  %349 = vst [vmem:[%s313 + $0x44] sm:$0xf] %v348
                  %v350 = vld [vmem:[%s312 + $0xd8] sm:$0xf]
                  %351 = vst [vmem:[%s313 + $0x48] sm:$0xf] %v350
                  %v352 = vld [vmem:[%s312 + $0xe4] sm:$0xf]
                  %353 = vst [vmem:[%s313 + $0x4c] sm:$0xf] %v352
                  %v354 = vld [vmem:[%s312 + $0xf0] sm:$0xf]
                  %355 = vst [vmem:[%s313 + $0x50] sm:$0xf] %v354
                  %v356 = vld [vmem:[%s312 + $0xfc] sm:$0xf]
                  %357 = vst [vmem:[%s313 + $0x54] sm:$0xf] %v356
                  %v358 = vld [vmem:[%s312 + $0x108] sm:$0xf]
                  %359 = vst [vmem:[%s313 + $0x58] sm:$0xf] %v358
                  %v360 = vld [vmem:[%s312 + $0x114] sm:$0xf]
                  %361 = vst [vmem:[%s313 + $0x5c] sm:$0xf] %v360
                  %v362 = vld [vmem:[%s312 + $0x120] sm:$0xf]
                  %363 = vst [vmem:[%s313 + $0x60] sm:$0xf] %v362
                  %v364 = vld [vmem:[%s312 + $0x12c] sm:$0xf]
                  %365 = vst [vmem:[%s313 + $0x64] sm:$0xf] %v364
                  %v366 = vld [vmem:[%s312 + $0x138] sm:$0xf]
                  %367 = vst [vmem:[%s313 + $0x68] sm:$0xf] %v366
                  %v368 = vld [vmem:[%s312 + $0x144] sm:$0xf]
                  %369 = vst [vmem:[%s313 + $0x6c] sm:$0xf] %v368
                  %v370 = vld [vmem:[%s312 + $0x150] sm:$0xf]
                  %371 = vst [vmem:[%s313 + $0x70] sm:$0xf] %v370
                  %v372 = vld [vmem:[%s312 + $0x15c] sm:$0xf]
                  %373 = vst [vmem:[%s313 + $0x74] sm:$0xf] %v372
                  %v374 = vld [vmem:[%s312 + $0x168] sm:$0xf]
                  %375 = vst [vmem:[%s313 + $0x78] sm:$0xf] %v374
                  %v376 = vld [vmem:[%s312 + $0x174] sm:$0xf]
                  %377 = vst [vmem:[%s313 + $0x7c] sm:$0xf] %v376
                  %v378 = vld [vmem:[%s312 + $0x180] sm:$0xf]
                  %379 = vst [vmem:[%s313 + $0x80] sm:$0xf] %v378
                  %v380 = vld [vmem:[%s312 + $0x18c] sm:$0xf]
                  %381 = vst [vmem:[%s313 + $0x84] sm:$0xf] %v380
                  %v382 = vld [vmem:[%s312 + $0x198] sm:$0xf]
                  %383 = vst [vmem:[%s313 + $0x88] sm:$0xf] %v382
                  %v384 = vld [vmem:[%s312 + $0x1a4] sm:$0xf]
                  %385 = vst [vmem:[%s313 + $0x8c] sm:$0xf] %v384
                  %v386 = vld [vmem:[%s312 + $0x1b0] sm:$0xf]
                  %387 = vst [vmem:[%s313 + $0x90] sm:$0xf] %v386
                  %v388 = vld [vmem:[%s312 + $0x1bc] sm:$0xf]
                  %389 = vst [vmem:[%s313 + $0x94] sm:$0xf] %v388
                  %v390 = vld [vmem:[%s312 + $0x1c8] sm:$0xf]
                  %391 = vst [vmem:[%s313 + $0x98] sm:$0xf] %v390
                  %v392 = vld [vmem:[%s312 + $0x1d4] sm:$0xf]
                  %393 = vst [vmem:[%s313 + $0x9c] sm:$0xf] %v392
                  %v394 = vld [vmem:[%s312 + $0x1e0] sm:$0xf]
                  %395 = vst [vmem:[%s313 + $0xa0] sm:$0xf] %v394
                  %v396 = vld [vmem:[%s312 + $0x1ec] sm:$0xf]
                  %397 = vst [vmem:[%s313 + $0xa4] sm:$0xf] %v396
                  %v398 = vld [vmem:[%s312 + $0x1f8] sm:$0xf]
                  %399 = vst [vmem:[%s313 + $0xa8] sm:$0xf] %v398
                  %v400 = vld [vmem:[%s312 + $0x204] sm:$0xf]
                  %401 = vst [vmem:[%s313 + $0xac] sm:$0xf] %v400
                  %v402 = vld [vmem:[%s312 + $0x210] sm:$0xf]
                  %403 = vst [vmem:[%s313 + $0xb0] sm:$0xf] %v402
                  %v404 = vld [vmem:[%s312 + $0x21c] sm:$0xf]
                  %405 = vst [vmem:[%s313 + $0xb4] sm:$0xf] %v404
                  %v406 = vld [vmem:[%s312 + $0x228] sm:$0xf]
                  %407 = vst [vmem:[%s313 + $0xb8] sm:$0xf] %v406
                  %v408 = vld [vmem:[%s312 + $0x234] sm:$0xf]
                  %409 = vst [vmem:[%s313 + $0xbc] sm:$0xf] %v408
                $region59: #{generator_forward.4} parent=46 // loop_footer
                  %s311 = sadd.s32 1, %s307
                $region60: #{generator_forward.4} parent=46 // loop_footer_branch
                  %306 = sbr.rel target = $region56
                $region61: #{generator_forward.4} parent=46 // loop_exit
                  _
              $region47: #{generator_forward.4} parent=31 // pred_fallthru
                _
            $region32: #{generator_forward.4} parent=27 // pred_fallthru
              _
            // Predicated region
            $region33: #{generator_forward.4} parent=27 // pred_check
              _
            $region34: #{generator_forward.4} parent=27 // pred_check_branch
              %189 = sbr.rel (0) target = $region36
            $region35: #{generator_forward.4} parent=27 // pred_region
              loop: start=0, step=1, limit=1
              $region37: #{generator_forward.4} parent=35 // loop_pre_header
                _
              $region38: #{generator_forward.4} parent=35 // loop_header
                %s192 = sphi 0, %s196
                %p193 = scmp.ge.s32.totalorder %s192, 1
                %s197 = sphi %s183, %s183
                %s198 = sphi %s178, %s178
              $region39: #{generator_forward.4} parent=35 // loop_header_branch
                %195 = sbr.rel (%p193) target = $region43
              $region40: #{generator_forward.4} parent=35 // loop_body
                %v199 = vld [vmem:[%s197] sm:$0xf]
                %200 = vst [vmem:[%s198] sm:$0xf] %v199
                %v201 = vld [vmem:[%s197 + $0xc] sm:$0xf]
                %202 = vst [vmem:[%s198 + $0x4] sm:$0xf] %v201
                %v203 = vld [vmem:[%s197 + $0x18] sm:$0xf]
                %204 = vst [vmem:[%s198 + $0x8] sm:$0xf] %v203
                %v205 = vld [vmem:[%s197 + $0x24] sm:$0xf]
                %206 = vst [vmem:[%s198 + $0xc] sm:$0xf] %v205
                %v207 = vld [vmem:[%s197 + $0x30] sm:$0xf]
                %208 = vst [vmem:[%s198 + $0x10] sm:$0xf] %v207
                %v209 = vld [vmem:[%s197 + $0x3c] sm:$0xf]
                %210 = vst [vmem:[%s198 + $0x14] sm:$0xf] %v209
                %v211 = vld [vmem:[%s197 + $0x48] sm:$0xf]
                %212 = vst [vmem:[%s198 + $0x18] sm:$0xf] %v211
                %v213 = vld [vmem:[%s197 + $0x54] sm:$0xf]
                %214 = vst [vmem:[%s198 + $0x1c] sm:$0xf] %v213
                %v215 = vld [vmem:[%s197 + $0x60] sm:$0xf]
                %216 = vst [vmem:[%s198 + $0x20] sm:$0xf] %v215
                %v217 = vld [vmem:[%s197 + $0x6c] sm:$0xf]
                %218 = vst [vmem:[%s198 + $0x24] sm:$0xf] %v217
                %v219 = vld [vmem:[%s197 + $0x78] sm:$0xf]
                %220 = vst [vmem:[%s198 + $0x28] sm:$0xf] %v219
                %v221 = vld [vmem:[%s197 + $0x84] sm:$0xf]
                %222 = vst [vmem:[%s198 + $0x2c] sm:$0xf] %v221
                %v223 = vld [vmem:[%s197 + $0x90] sm:$0xf]
                %224 = vst [vmem:[%s198 + $0x30] sm:$0xf] %v223
                %v225 = vld [vmem:[%s197 + $0x9c] sm:$0xf]
                %226 = vst [vmem:[%s198 + $0x34] sm:$0xf] %v225
                %v227 = vld [vmem:[%s197 + $0xa8] sm:$0xf]
                %228 = vst [vmem:[%s198 + $0x38] sm:$0xf] %v227
                %v229 = vld [vmem:[%s197 + $0xb4] sm:$0xf]
                %230 = vst [vmem:[%s198 + $0x3c] sm:$0xf] %v229
                %v231 = vld [vmem:[%s197 + $0xc0] sm:$0xf]
                %232 = vst [vmem:[%s198 + $0x40] sm:$0xf] %v231
                %v233 = vld [vmem:[%s197 + $0xcc] sm:$0xf]
                %234 = vst [vmem:[%s198 + $0x44] sm:$0xf] %v233
                %v235 = vld [vmem:[%s197 + $0xd8] sm:$0xf]
                %236 = vst [vmem:[%s198 + $0x48] sm:$0xf] %v235
                %v237 = vld [vmem:[%s197 + $0xe4] sm:$0xf]
                %238 = vst [vmem:[%s198 + $0x4c] sm:$0xf] %v237
                %v239 = vld [vmem:[%s197 + $0xf0] sm:$0xf]
                %240 = vst [vmem:[%s198 + $0x50] sm:$0xf] %v239
                %v241 = vld [vmem:[%s197 + $0xfc] sm:$0xf]
                %242 = vst [vmem:[%s198 + $0x54] sm:$0xf] %v241
                %v243 = vld [vmem:[%s197 + $0x108] sm:$0xf]
                %244 = vst [vmem:[%s198 + $0x58] sm:$0xf] %v243
                %v245 = vld [vmem:[%s197 + $0x114] sm:$0xf]
                %246 = vst [vmem:[%s198 + $0x5c] sm:$0xf] %v245
                %v247 = vld [vmem:[%s197 + $0x120] sm:$0xf]
                %248 = vst [vmem:[%s198 + $0x60] sm:$0xf] %v247
                %v249 = vld [vmem:[%s197 + $0x12c] sm:$0xf]
                %250 = vst [vmem:[%s198 + $0x64] sm:$0xf] %v249
                %v251 = vld [vmem:[%s197 + $0x138] sm:$0xf]
                %252 = vst [vmem:[%s198 + $0x68] sm:$0xf] %v251
                %v253 = vld [vmem:[%s197 + $0x144] sm:$0xf]
                %254 = vst [vmem:[%s198 + $0x6c] sm:$0xf] %v253
                %v255 = vld [vmem:[%s197 + $0x150] sm:$0xf]
                %256 = vst [vmem:[%s198 + $0x70] sm:$0xf] %v255
                %v257 = vld [vmem:[%s197 + $0x15c] sm:$0xf]
                %258 = vst [vmem:[%s198 + $0x74] sm:$0xf] %v257
                %v259 = vld [vmem:[%s197 + $0x168] sm:$0xf]
                %260 = vst [vmem:[%s198 + $0x78] sm:$0xf] %v259
                %v261 = vld [vmem:[%s197 + $0x174] sm:$0xf]
                %262 = vst [vmem:[%s198 + $0x7c] sm:$0xf] %v261
                %v263 = vld [vmem:[%s197 + $0x180] sm:$0xf]
                %264 = vst [vmem:[%s198 + $0x80] sm:$0xf] %v263
                %v265 = vld [vmem:[%s197 + $0x18c] sm:$0xf]
                %266 = vst [vmem:[%s198 + $0x84] sm:$0xf] %v265
                %v267 = vld [vmem:[%s197 + $0x198] sm:$0xf]
                %268 = vst [vmem:[%s198 + $0x88] sm:$0xf] %v267
                %v269 = vld [vmem:[%s197 + $0x1a4] sm:$0xf]
                %270 = vst [vmem:[%s198 + $0x8c] sm:$0xf] %v269
                %v271 = vld [vmem:[%s197 + $0x1b0] sm:$0xf]
                %272 = vst [vmem:[%s198 + $0x90] sm:$0xf] %v271
                %v273 = vld [vmem:[%s197 + $0x1bc] sm:$0xf]
                %274 = vst [vmem:[%s198 + $0x94] sm:$0xf] %v273
                %v275 = vld [vmem:[%s197 + $0x1c8] sm:$0xf]
                %276 = vst [vmem:[%s198 + $0x98] sm:$0xf] %v275
                %v277 = vld [vmem:[%s197 + $0x1d4] sm:$0xf]
                %278 = vst [vmem:[%s198 + $0x9c] sm:$0xf] %v277
                %v279 = vld [vmem:[%s197 + $0x1e0] sm:$0xf]
                %280 = vst [vmem:[%s198 + $0xa0] sm:$0xf] %v279
                %v281 = vld [vmem:[%s197 + $0x1ec] sm:$0xf]
                %282 = vst [vmem:[%s198 + $0xa4] sm:$0xf] %v281
                %v283 = vld [vmem:[%s197 + $0x1f8] sm:$0xf]
                %284 = vst [vmem:[%s198 + $0xa8] sm:$0xf] %v283
                %v285 = vld [vmem:[%s197 + $0x204] sm:$0xf]
                %286 = vst [vmem:[%s198 + $0xac] sm:$0xf] %v285
                %v287 = vld [vmem:[%s197 + $0x210] sm:$0xf]
                %288 = vst [vmem:[%s198 + $0xb0] sm:$0xf] %v287
                %v289 = vld [vmem:[%s197 + $0x21c] sm:$0xf]
                %290 = vst [vmem:[%s198 + $0xb4] sm:$0xf] %v289
                %v291 = vld [vmem:[%s197 + $0x228] sm:$0xf]
                %292 = vst [vmem:[%s198 + $0xb8] sm:$0xf] %v291
                %v293 = vld [vmem:[%s197 + $0x234] sm:$0xf]
                %294 = vst [vmem:[%s198 + $0xbc] sm:$0xf] %v293
              $region41: #{generator_forward.4} parent=35 // loop_footer
                %s196 = sadd.s32 1, %s192
              $region42: #{generator_forward.4} parent=35 // loop_footer_branch
                %191 = sbr.rel target = $region38
              $region43: #{generator_forward.4} parent=35 // loop_exit
                _
            $region36: #{generator_forward.4} parent=27 // pred_fallthru
              _
          $region28: #{generator_forward.4} parent=23 // pred_fallthru
            _
          %410 = vnop
        $region24: #{generator_forward.4} parent=19 // pred_fallthru
          _
        // Predicated region
        $region62: #{generator_forward.4} parent=19 // pred_check
          %p411 = pneg %p104
        $region63: #{generator_forward.4} parent=19 // pred_check_branch
          %413 = sbr.rel (%p411) target = $region65
        $region64: #{generator_forward.4} parent=19 // pred_region
          %p414 = scmp.lt.s32.totalorder %s17, 2
          %s415 = scalar_select %p414, %s17, 2
          %s416 = scalar_lea.vmem %s2, %s415
        $region65: #{generator_forward.4} parent=19 // pred_fallthru
          _
      $region20: #{generator_forward.4} parent=5 // pred_fallthru
        _
      %p417 = scmp.le.s32.totalorder 1, %s9
      %p418 = scmp.lt.s32.totalorder %s9, 4
      %p419 = pnand %p417, %p418
      %p420 = pneg %p419
      // Predicated region
      $region66: #{generator_forward.4} parent=5 // pred_check
        _
      $region67: #{generator_forward.4} parent=5 // pred_check_branch
        %422 = sbr.rel (%p419) target = $region69
      $region68: #{generator_forward.4} parent=5 // pred_region
        %s423 = ssub.s32 %s9, 1
        %s424 = sand.u32 %s71, 1
        %s425 = sand.u32 %s71, 1
        %s426 = smul.addr %s425, 192
        %s427 = scalar_lea.vmem [#allocation3], %s426
        // Predicated region
        $region70: #{generator_forward.4} parent=68 // pred_check
          %p428 = pneg %p84
        $region71: #{generator_forward.4} parent=68 // pred_check_branch
          %430 = sbr.rel (%p428) target = $region73
        $region72: #{generator_forward.4} parent=68 // pred_region
          _
        $region73: #{generator_forward.4} parent=68 // pred_fallthru
          _
        %s431 = smul.u32 3, %s19
        %s432 = smul.u32 3, %s21
        %p433 = scmp.lt.s32.totalorder %s431, 2
        %s434 = scalar_select %p433, %s431, 2
        %p435 = scmp.lt.s32.totalorder %s432, 2
        %s436 = scalar_select %p435, %s432, 2
        %s437 = smul.addr %s434, 3
        %s438 = sadd.s32 %s436, %s437
        %s439 = smul.addr %s438, 4
        %s440 = scalar_lea.vmem %s0, %s439
        %p441 = pneg %p56
        %p442 = pneg %p53
        %s443 = sand.u32 %s71, 1
        %s444 = sand.u32 %s71, 1
        %s445 = smul.addr %s444, 192
        %s446 = scalar_lea.vmem [#allocation3], %s445
        %p447 = pneg %p84
        %p448 = pneg %p81
        %p449 = scmp.lt.s32.totalorder %s20, 2
        %s450 = scalar_select %p449, %s20, 2
        %s451 = scalar_lea.vmem %s2, %s450
        %p452 = pneg %p110
        %p453 = pneg %p107
        %p454 = pneg %p138
        %p455 = pneg %p135
        %s456 = sand.u32 %s125, 1
        %s457 = sand.u32 %s125, 1
        %s458 = smul.addr %s457, 12
        %s459 = scalar_lea.vmem [#allocation4], %s458
        %s460 = smul.u32 3, %s19
        %s461 = smul.u32 3, %s21
        %p462 = scmp.lt.s32.totalorder %s460, 2
        %s463 = scalar_select %p462, %s460, 2
        %p464 = scmp.lt.s32.totalorder %s461, 2
        %s465 = scalar_select %p464, %s461, 2
        %s466 = smul.addr %s463, 3
        %s467 = sadd.s32 %s465, %s466
        %s468 = smul.addr %s467, 4
        %s469 = scalar_lea.vmem %s0, %s468
        %s470 = smul.u32 3, %s19
        %s471 = smul.u32 3, %s21
        %s472 = smul.u32 48, %s21
        %p473 = scmp.lt.s32.totalorder %s20, 2
        %s474 = scalar_select %p473, %s20, 2
        %s475 = scalar_lea.vmem %s2, %s474
        %s476 = smul.u32 3, %s19
        %p478 = scmp.eq.s32.totalorder %s21, 0
        // Predicated region
        $region74: #{generator_forward.4} parent=68 // pred_check
          %p479 = pneg %p478
        $region75: #{generator_forward.4} parent=68 // pred_check_branch
          %481 = sbr.rel (%p479) target = $region77
        $region76: #{generator_forward.4} parent=68 // pred_region
          %482 = vst [vmem:[#allocation2] sm:$0xff] 0.0
          %483 = vst [vmem:[#allocation2 + $0x8] sm:$0xff] 0.0
          %484 = vst [vmem:[#allocation2 + $0x10] sm:$0xff] 0.0
        $region77: #{generator_forward.4} parent=68 // pred_fallthru
          _
        %v485 = vld [vmem:[#allocation2] sm:$0xff]
        %v486 = vld [vmem:[#allocation2 + $0x8] sm:$0xff]
        %v487 = vld [vmem:[#allocation2 + $0x10] sm:$0xff]
        %v488 = vld [vmem:[%s469] sm:$0xff]
        %v489 = vld [vmem:[%s469 + $0x8] sm:$0xf]
        %v490 = vld [vmem:[%s469 + $0xc] sm:$0xff]
        %v491 = vld [vmem:[%s469 + $0x14] sm:$0xf]
        %v492 = vld [vmem:[%s469 + $0x18] sm:$0xff]
        %v493 = vld [vmem:[%s469 + $0x20] sm:$0xf]
        %v494 = vld [vmem:[%s427] sm:$0xf]
        %v495 = vld [vmem:[%s427 + $0x4] sm:$0xf]
        %v496 = vld [vmem:[%s427 + $0x8] sm:$0xf]
        %v497 = vld [vmem:[%s427 + $0xc] sm:$0xf]
        %v498 = vld [vmem:[%s427 + $0x10] sm:$0xf]
        %v499 = vld [vmem:[%s427 + $0x14] sm:$0xf]
        %v500 = vld [vmem:[%s427 + $0x18] sm:$0xf]
        %v501 = vld [vmem:[%s427 + $0x1c] sm:$0xf]
        %v502 = vld [vmem:[%s427 + $0x20] sm:$0xf]
        %v503 = vld [vmem:[%s427 + $0x24] sm:$0xf]
        %v504 = vld [vmem:[%s427 + $0x28] sm:$0xf]
        %v505 = vld [vmem:[%s427 + $0x2c] sm:$0xf]
        %v506 = vld [vmem:[%s427 + $0x30] sm:$0xf]
        %v507 = vld [vmem:[%s427 + $0x34] sm:$0xf]
        %v508 = vld [vmem:[%s427 + $0x38] sm:$0xf]
        %v509 = vld [vmem:[%s427 + $0x3c] sm:$0xf]
        %v510 = vld [vmem:[%s427 + $0x40] sm:$0xf]
        %v511 = vld [vmem:[%s427 + $0x44] sm:$0xf]
        %v512 = vld [vmem:[%s427 + $0x48] sm:$0xf]
        %v513 = vld [vmem:[%s427 + $0x4c] sm:$0xf]
        %v514 = vld [vmem:[%s427 + $0x50] sm:$0xf]
        %v515 = vld [vmem:[%s427 + $0x54] sm:$0xf]
        %v516 = vld [vmem:[%s427 + $0x58] sm:$0xf]
        %v517 = vld [vmem:[%s427 + $0x5c] sm:$0xf]
        %v518 = vld [vmem:[%s427 + $0x60] sm:$0xf]
        %v519 = vld [vmem:[%s427 + $0x64] sm:$0xf]
        %v520 = vld [vmem:[%s427 + $0x68] sm:$0xf]
        %v521 = vld [vmem:[%s427 + $0x6c] sm:$0xf]
        %v522 = vld [vmem:[%s427 + $0x70] sm:$0xf]
        %v523 = vld [vmem:[%s427 + $0x74] sm:$0xf]
        %v524 = vld [vmem:[%s427 + $0x78] sm:$0xf]
        %v525 = vld [vmem:[%s427 + $0x7c] sm:$0xf]
        %v526 = vld [vmem:[%s427 + $0x80] sm:$0xf]
        %v527 = vld [vmem:[%s427 + $0x84] sm:$0xf]
        %v528 = vld [vmem:[%s427 + $0x88] sm:$0xf]
        %v529 = vld [vmem:[%s427 + $0x8c] sm:$0xf]
        %v530 = vld [vmem:[%s427 + $0x90] sm:$0xf]
        %v531 = vld [vmem:[%s427 + $0x94] sm:$0xf]
        %v532 = vld [vmem:[%s427 + $0x98] sm:$0xf]
        %v533 = vld [vmem:[%s427 + $0x9c] sm:$0xf]
        %v534 = vld [vmem:[%s427 + $0xa0] sm:$0xf]
        %v535 = vld [vmem:[%s427 + $0xa4] sm:$0xf]
        %v536 = vld [vmem:[%s427 + $0xa8] sm:$0xf]
        %v537 = vld [vmem:[%s427 + $0xac] sm:$0xf]
        %v538 = vld [vmem:[%s427 + $0xb0] sm:$0xf]
        %v539 = vld [vmem:[%s427 + $0xb4] sm:$0xf]
        %v540 = vld [vmem:[%s427 + $0xb8] sm:$0xf]
        %v541 = vld [vmem:[%s427 + $0xbc] sm:$0xf]
        %v548 = vunpack.c.l.b16 %v488
        %v549 = vunpack.c.h.b16 %v488
        %v550 = vunpack.c.l.b16 %v489
        %v551 = vunpack.c.l.b16 %v490
        %v552 = vunpack.c.h.b16 %v490
        %v553 = vunpack.c.l.b16 %v491
        %v554 = vunpack.c.l.b16 %v492
        %v555 = vunpack.c.h.b16 %v492
        %v556 = vunpack.c.l.b16 %v493
        %v557 = vpack.c.b16 %v551, %v548
        %v558 = vpack.c.b16 %v552, %v549
        %v559 = vpack.c.b16 %v553, %v550
        %v560 = vpack.c.b16 %v554, %v554
        %v561 = vpack.c.b16 %v555, %v555
        %v562 = vpack.c.b16 %v556, %v556
        %v617 = vunpack.c.l.b16 %v494
        %v618 = vunpack.c.l.b16 %v495
        %v619 = vunpack.c.l.b16 %v496
        %v620 = vunpack.c.l.b16 %v497
        %v621 = vunpack.c.l.b16 %v498
        %v622 = vunpack.c.l.b16 %v499
        %v623 = vunpack.c.l.b16 %v500
        %v624 = vunpack.c.l.b16 %v501
        %v625 = vunpack.c.l.b16 %v502
        %v626 = vunpack.c.l.b16 %v503
        %v627 = vunpack.c.l.b16 %v504
        %v628 = vunpack.c.l.b16 %v505
        %v629 = vunpack.c.l.b16 %v506
        %v630 = vunpack.c.l.b16 %v507
        %v631 = vunpack.c.l.b16 %v508
        %v632 = vunpack.c.l.b16 %v509
        %v633 = vunpack.c.l.b16 %v510
        %v634 = vunpack.c.l.b16 %v511
        %v635 = vunpack.c.l.b16 %v512
        %v636 = vunpack.c.l.b16 %v513
        %v637 = vunpack.c.l.b16 %v514
        %v638 = vunpack.c.l.b16 %v515
        %v639 = vunpack.c.l.b16 %v516
        %v640 = vunpack.c.l.b16 %v517
        %v641 = vunpack.c.l.b16 %v518
        %v642 = vunpack.c.l.b16 %v519
        %v643 = vunpack.c.l.b16 %v520
        %v644 = vunpack.c.l.b16 %v521
        %v645 = vunpack.c.l.b16 %v522
        %v646 = vunpack.c.l.b16 %v523
        %v647 = vunpack.c.l.b16 %v524
        %v648 = vunpack.c.l.b16 %v525
        %v649 = vunpack.c.l.b16 %v526
        %v650 = vunpack.c.l.b16 %v527
        %v651 = vunpack.c.l.b16 %v528
        %v652 = vunpack.c.l.b16 %v529
        %v653 = vunpack.c.l.b16 %v530
        %v654 = vunpack.c.l.b16 %v531
        %v655 = vunpack.c.l.b16 %v532
        %v656 = vunpack.c.l.b16 %v533
        %v657 = vunpack.c.l.b16 %v534
        %v658 = vunpack.c.l.b16 %v535
        %v659 = vunpack.c.l.b16 %v536
        %v660 = vunpack.c.l.b16 %v537
        %v661 = vunpack.c.l.b16 %v538
        %v662 = vunpack.c.l.b16 %v539
        %v663 = vunpack.c.l.b16 %v540
        %v664 = vunpack.c.l.b16 %v541
        %v665 = vpack.c.b16 %v618, %v617
        %v666 = vpack.c.b16 %v620, %v619
        %v667 = vpack.c.b16 %v622, %v621
        %v668 = vpack.c.b16 %v624, %v623
        %v669 = vpack.c.b16 %v626, %v625
        %v670 = vpack.c.b16 %v628, %v627
        %v671 = vpack.c.b16 %v630, %v629
        %v672 = vpack.c.b16 %v632, %v631
        %v673 = vpack.c.b16 %v634, %v633
        %v674 = vpack.c.b16 %v636, %v635
        %v675 = vpack.c.b16 %v638, %v637
        %v676 = vpack.c.b16 %v640, %v639
        %v677 = vpack.c.b16 %v642, %v641
        %v678 = vpack.c.b16 %v644, %v643
        %v679 = vpack.c.b16 %v646, %v645
        %v680 = vpack.c.b16 %v648, %v647
        %v681 = vpack.c.b16 %v650, %v649
        %v682 = vpack.c.b16 %v652, %v651
        %v683 = vpack.c.b16 %v654, %v653
        %v684 = vpack.c.b16 %v656, %v655
        %v685 = vpack.c.b16 %v658, %v657
        %v686 = vpack.c.b16 %v660, %v659
        %v687 = vpack.c.b16 %v662, %v661
        %v688 = vpack.c.b16 %v664, %v663
        %713 = vmatprep.subr.bf16.mxu0 0
        %714 = vmatpush1.bf16.msra.mxu0 %v665
        %715 = vmatprep.subr.bf16.mxu0 0
        %716 = vmatpush1.bf16.msra.mxu0 %v666
        %717 = vmatprep.subr.bf16.mxu0 0
        %718 = vmatpush1.bf16.msra.mxu0 %v667
        %719 = vmatprep.subr.bf16.mxu0 0
        %720 = vmatpush1.bf16.msra.mxu0 %v668
        %721 = vmatprep.subr.bf16.mxu0 0
        %722 = vmatpush1.bf16.msra.mxu0 %v669
        %723 = vmatprep.subr.bf16.mxu0 0
        %724 = vmatpush1.bf16.msra.mxu0 %v670
        %725 = vmatprep.subr.bf16.mxu0 0
        %726 = vmatpush1.bf16.msra.mxu0 %v671
        %727 = vmatprep.subr.bf16.mxu0 0
        %728 = vmatpush1.bf16.msra.mxu0 %v672
        %729 = vmatprep.subr.bf16.mxu0 0
        %730 = vmatpush1.bf16.msra.mxu0 %v673
        %731 = vmatprep.subr.bf16.mxu0 0
        %732 = vmatpush1.bf16.msra.mxu0 %v674
        %733 = vmatprep.subr.bf16.mxu0 0
        %734 = vmatpush1.bf16.msra.mxu0 %v675
        %735 = vmatprep.subr.bf16.mxu0 0
        %736 = vmatpush1.bf16.msra.mxu0 %v676
        %737 = vmatprep.subr.bf16.mxu0 0
        %738 = vmatpush1.bf16.msra.mxu0 %v677
        %739 = vmatprep.subr.bf16.mxu0 0
        %740 = vmatpush1.bf16.msra.mxu0 %v678
        %741 = vmatprep.subr.bf16.mxu0 0
        %742 = vmatpush1.bf16.msra.mxu0 %v679
        %743 = vmatprep.subr.bf16.mxu0 0
        %744 = vmatpush1.bf16.msra.mxu0 %v680
        %745 = vmatprep.mubr.bf16.mxu0 %v558
        %746 = vmatmul.mubr.bf16.gmra.mrb[0].mxu0 %v557
        %v747 = vpop.f32.mrb[0].mxu0
        %v748 = vadd.f32 0.0, %v747
        %v749 = vpop.f32.mrb[0].mxu0
        %v750 = vpop.f32.mrb[0].mxu0
        %v751 = vadd.f32 0.0, %v750
        %v752 = vpop.f32.mrb[0].mxu0
        %753 = vmatprep.mubr.bf16.mxu0 %v561
        %754 = vmatmul.mubr.bf16.gmra.mrb[0].mxu0 %v560
        %v755 = vpop.f32.mrb[0].mxu0
        %v756 = vadd.f32 0.0, %v755
        %v757 = vpop.f32.mrb[0].mxu0
        %v758 = vpop.f32.mrb[0].mxu0
        %v759 = vpop.f32.mrb[0].mxu0
        %760 = vdwg.mxu0
        %761 = vmatprep.subr.bf16.mxu0 0
        %762 = vmatpush1.bf16.msra.mxu0 %v681
        %763 = vmatprep.subr.bf16.mxu0 0
        %764 = vmatpush1.bf16.msra.mxu0 %v682
        %765 = vmatprep.subr.bf16.mxu0 0
        %766 = vmatpush1.bf16.msra.mxu0 %v683
        %767 = vmatprep.subr.bf16.mxu0 0
        %768 = vmatpush1.bf16.msra.mxu0 %v684
        %769 = vmatprep.subr.bf16.mxu0 0
        %770 = vmatpush1.bf16.msra.mxu0 %v685
        %771 = vmatprep.subr.bf16.mxu0 0
        %772 = vmatpush1.bf16.msra.mxu0 %v686
        %773 = vmatprep.subr.bf16.mxu0 0
        %774 = vmatpush1.bf16.msra.mxu0 %v687
        %775 = vmatprep.subr.bf16.mxu0 0
        %776 = vmatpush1.bf16.msra.mxu0 %v688
        %777 = vmatprep.subr.bf16.mxu0 0
        %778 = vmatpush1.bf16.msra.mxu0 0
        %779 = vmatprep.subr.bf16.mxu0 0
        %780 = vmatpush1.bf16.msra.mxu0 0
        %781 = vmatprep.subr.bf16.mxu0 0
        %782 = vmatpush1.bf16.msra.mxu0 0
        %783 = vmatprep.subr.bf16.mxu0 0
        %784 = vmatpush1.bf16.msra.mxu0 0
        %785 = vmatprep.subr.bf16.mxu0 0
        %786 = vmatpush1.bf16.msra.mxu0 0
        %787 = vmatprep.subr.bf16.mxu0 0
        %788 = vmatpush1.bf16.msra.mxu0 0
        %789 = vmatprep.subr.bf16.mxu0 0
        %790 = vmatpush1.bf16.msra.mxu0 0
        %791 = vmatprep.subr.bf16.mxu0 0
        %792 = vmatpush1.bf16.msra.mxu0 0
        %793 = vmatprep.mubr.bf16.mxu0 0
        %794 = vmatmul.mubr.bf16.gmra.mrb[0].mxu0 %v559
        %v795 = vpop.f32.mrb[0].mxu0
        %v796 = vadd.f32 %v748, %v795
        %v797 = vpop.f32.mrb[0].mxu0
        %v798 = vpop.f32.mrb[0].mxu0
        %v799 = vadd.f32 %v751, %v798
        %v800 = vpop.f32.mrb[0].mxu0
        %801 = vmatprep.mubr.bf16.mxu0 0
        %802 = vmatmul.mubr.bf16.gmra.mrb[0].mxu0 %v562
        %v803 = vpop.f32.mrb[0].mxu0
        %v804 = vadd.f32 %v756, %v803
        %v805 = vpop.f32.mrb[0].mxu0
        %v806 = vpop.f32.mrb[0].mxu0
        %v807 = vpop.f32.mrb[0].mxu0
        %808 = vdwg.mxu0
        %v809 = vadd.f32 %v485, %v796
        %v810 = vadd.f32 %v486, %v799
        %v811 = vadd.f32 %v487, %v804
        %812 = vst [vmem:[#allocation2] sm:$0xff] %v809
        %813 = vst [vmem:[#allocation2 + $0x8] sm:$0xff] %v810
        %814 = vst [vmem:[#allocation2 + $0x10] sm:$0xff] %v811
        // Predicated region
        $region78: #{generator_forward.4} parent=68 // pred_check
          %p815 = pneg %p478
        $region79: #{generator_forward.4} parent=68 // pred_check_branch
          %817 = sbr.rel (%p815) target = $region81
        $region80: #{generator_forward.4} parent=68 // pred_region
          %v818 = vld [vmem:[#allocation2] sm:$0xff]
          %v819 = vld [vmem:[#allocation2 + $0x8] sm:$0xff]
          %v820 = vld [vmem:[#allocation2 + $0x10] sm:$0xff]
          %v821 = vld [vmem:[%s475] sm:$0x1]
          %v823 = vlaneseq
          %v824 = vshrl.u32 %v823, 7
          %v825 = vsub.s32 0, %v824
          %v826 = vrot.slane %v821, %v825
          %v828 = vadd.f32 %v818, %v826
          %v829 = vadd.f32 %v819, %v826
          %v830 = vadd.f32 %v820, %v826
          %v831 = vxor.u32 %v828, 2147483648
          %v832 = vxor.u32 %v829, 2147483648
          %v833 = vxor.u32 %v830, 2147483648
          %v834 = vmul.f32 %v831, 1.442695
          %v835 = vpow.pop %v834
          %v836 = vmul.f32 %v832, 1.442695
          %v837 = vpow.pop %v836
          %v838 = vmul.f32 %v833, 1.442695
          %v839 = vpow.pop %v838
          %v840 = vadd.f32 %v835, 1.0
          %v841 = vadd.f32 %v837, 1.0
          %v842 = vadd.f32 %v839, 1.0
          %v843 = vrcp.pop %v840
          %v844 = vmul.f32 1.0, %v843
          %v845 = vrcp.pop %v841
          %v846 = vmul.f32 1.0, %v845
          %v847 = vrcp.pop %v842
          %v848 = vmul.f32 1.0, %v847
          %v849 = vpack.c.bf16 %v846, %v844
          %v850 = vpack.c.bf16 %v848, %v848
          %v853 = vunpack.c.l.b16 %v849
          %v854 = vunpack.c.h.b16 %v849
          %v855 = vunpack.c.l.b16 %v850
          %v856 = vpack.c.b16 %v853, %v853
          %v857 = vpack.c.b16 %v854, %v854
          %v858 = vpack.c.b16 %v855, %v855
          %862 = vst [vmem:[%s459] sm:$0xf] %v856
          %863 = vst [vmem:[%s459 + $0x4] sm:$0xf] %v857
          %864 = vst [vmem:[%s459 + $0x8] sm:$0xf] %v858
        $region81: #{generator_forward.4} parent=68 // pred_fallthru
          _
        %s865 = sand.u32 %s125, 1
        %s866 = sand.u32 %s125, 1
        %s867 = smul.addr %s866, 12
        %s868 = scalar_lea.vmem [#allocation4], %s867
        // Predicated region
        $region82: #{generator_forward.4} parent=68 // pred_check
          %p869 = pneg %p135
        $region83: #{generator_forward.4} parent=68 // pred_check_branch
          %871 = sbr.rel (%p869) target = $region85
        $region84: #{generator_forward.4} parent=68 // pred_region
          %s872 = smul.u32 3, %s19
          %s873 = smul.addr %s872, 3
          %s874 = sadd.s32 %s20, %s873
          %s875 = smul.addr %s874, 4
          %s876 = scalar_lea.vmem %s3, %s875
          // Predicated region
          $region86: #{generator_forward.4} parent=84 // pred_check
            _
          $region87: #{generator_forward.4} parent=84 // pred_check_branch
            %878 = sbr.rel (0) target = $region89
          $region88: #{generator_forward.4} parent=84 // pred_region
            // Predicated region
            $region90: #{generator_forward.4} parent=88 // pred_check
              _
            $region91: #{generator_forward.4} parent=88 // pred_check_branch
              %880 = sbr.rel target = $region93
            $region92: #{generator_forward.4} parent=88 // pred_region
              // Predicated region
              $region105: #{generator_forward.4} parent=92 // pred_check
                _
              $region106: #{generator_forward.4} parent=92 // pred_check_branch
                %899 = sbr.rel (0) target = $region108
              $region107: #{generator_forward.4} parent=92 // pred_region
                loop: start=0, step=1, limit=1
                $region109: #{generator_forward.4} parent=107 // loop_pre_header
                  _
                $region110: #{generator_forward.4} parent=107 // loop_header
                  %s901 = sphi 0, %s905
                  %p902 = scmp.ge.s32.totalorder %s901, 1
                  %s906 = sphi %s868, %s868
                  %s907 = sphi %s876, %s876
                $region111: #{generator_forward.4} parent=107 // loop_header_branch
                  %904 = sbr.rel (%p902) target = $region115
                $region112: #{generator_forward.4} parent=107 // loop_body
                  _
                $region113: #{generator_forward.4} parent=107 // loop_footer
                  %s905 = sadd.s32 1, %s901
                $region114: #{generator_forward.4} parent=107 // loop_footer_branch
                  %900 = sbr.rel target = $region110
                $region115: #{generator_forward.4} parent=107 // loop_exit
                  _
                loop: start=0, step=1, limit=1
                $region116: #{generator_forward.4} parent=107 // loop_pre_header
                  _
                $region117: #{generator_forward.4} parent=107 // loop_header
                  %s910 = sphi 0, %s914
                  %p911 = scmp.ge.s32.totalorder %s910, 1
                  %s915 = sphi %s868, %s868
                  %s916 = sphi %s876, %s876
                $region118: #{generator_forward.4} parent=107 // loop_header_branch
                  %913 = sbr.rel (%p911) target = $region122
                $region119: #{generator_forward.4} parent=107 // loop_body
                  %v917 = vld [vmem:[%s915] sm:$0xf]
                  %918 = vst [vmem:[%s916] sm:$0xf] %v917
                  %v919 = vld [vmem:[%s915 + $0x4] sm:$0xf]
                  %920 = vst [vmem:[%s916 + $0xc] sm:$0xf] %v919
                  %v921 = vld [vmem:[%s915 + $0x8] sm:$0xf]
                  %922 = vst [vmem:[%s916 + $0x18] sm:$0xf] %v921
                $region120: #{generator_forward.4} parent=107 // loop_footer
                  %s914 = sadd.s32 1, %s910
                $region121: #{generator_forward.4} parent=107 // loop_footer_branch
                  %909 = sbr.rel target = $region117
                $region122: #{generator_forward.4} parent=107 // loop_exit
                  _
              $region108: #{generator_forward.4} parent=92 // pred_fallthru
                _
            $region93: #{generator_forward.4} parent=88 // pred_fallthru
              _
            // Predicated region
            $region94: #{generator_forward.4} parent=88 // pred_check
              _
            $region95: #{generator_forward.4} parent=88 // pred_check_branch
              %882 = sbr.rel (0) target = $region97
            $region96: #{generator_forward.4} parent=88 // pred_region
              loop: start=0, step=1, limit=1
              $region98: #{generator_forward.4} parent=96 // loop_pre_header
                _
              $region99: #{generator_forward.4} parent=96 // loop_header
                %s885 = sphi 0, %s889
                %p886 = scmp.ge.s32.totalorder %s885, 1
                %s890 = sphi %s868, %s868
                %s891 = sphi %s876, %s876
              $region100: #{generator_forward.4} parent=96 // loop_header_branch
                %888 = sbr.rel (%p886) target = $region104
              $region101: #{generator_forward.4} parent=96 // loop_body
                %v892 = vld [vmem:[%s890] sm:$0xf]
                %893 = vst [vmem:[%s891] sm:$0xf] %v892
                %v894 = vld [vmem:[%s890 + $0x4] sm:$0xf]
                %895 = vst [vmem:[%s891 + $0xc] sm:$0xf] %v894
                %v896 = vld [vmem:[%s890 + $0x8] sm:$0xf]
                %897 = vst [vmem:[%s891 + $0x18] sm:$0xf] %v896
              $region102: #{generator_forward.4} parent=96 // loop_footer
                %s889 = sadd.s32 1, %s885
              $region103: #{generator_forward.4} parent=96 // loop_footer_branch
                %884 = sbr.rel target = $region99
              $region104: #{generator_forward.4} parent=96 // loop_exit
                _
            $region97: #{generator_forward.4} parent=88 // pred_fallthru
              _
          $region89: #{generator_forward.4} parent=84 // pred_fallthru
            _
          %923 = vnop
        $region85: #{generator_forward.4} parent=68 // pred_fallthru
          _
      $region69: #{generator_forward.4} parent=5 // pred_fallthru
        _
      %p924 = scmp.le.s32.totalorder 2, %s9
      // Predicated region
      $region123: #{generator_forward.4} parent=5 // pred_check
        %p925 = pneg %p924
      $region124: #{generator_forward.4} parent=5 // pred_check_branch
        %927 = sbr.rel (%p925) target = $region126
      $region125: #{generator_forward.4} parent=5 // pred_region
        %s928 = ssub.s32 %s9, 2
        // Predicated region
        $region127: #{generator_forward.4} parent=125 // pred_check
          %p929 = pneg %p141
        $region128: #{generator_forward.4} parent=125 // pred_check_branch
          %931 = sbr.rel (%p929) target = $region130
        $region129: #{generator_forward.4} parent=125 // pred_region
          %s932 = sand.u32 %s126, 1
          %s933 = sand.u32 %s126, 1
          %s934 = smul.addr %s933, 12
          %s935 = scalar_lea.vmem [#allocation4], %s934
        $region130: #{generator_forward.4} parent=125 // pred_fallthru
          _
      $region126: #{generator_forward.4} parent=5 // pred_fallthru
        _
    $region6: #{generator_forward.4} parent=1 // loop_footer
      %s13 = sadd.s32 1, %s9
    $region7: #{generator_forward.4} parent=1 // loop_footer_branch
      %8 = sbr.rel target = $region3
    $region8: #{generator_forward.4} parent=1 // loop_exit
      _

// kernel: generator_forward.5
$region0: #{generator_forward.5}
  #allocation0 [shape = 'u32[]', space=smem, size = 0x4, offset = 0x4, fixed_abs, tag = 'smem constant byte address 0x4 - core index']
  #allocation1 [shape = 'u32[144,128]{1,0:T(1,128)}', space=vmem, size = 0x12000, scoped, tag = 'internal scratch']
  #allocation2 [shape = 'f32[24,128]{1,0:T(8,128)}', space=vmem, size = 0x3000, scoped, tag = 'scratch operand']
  %s0 = inlined_call_operand.vmem [shape: bf16[24,384], index: 0, kind: input, shape index: {}]
  %s1 = inlined_call_operand.vmem [shape: bf16[384,256], index: 1, kind: input, shape index: {}]
  %s2 = inlined_call_operand.vmem [shape: f32[1,256], index: 2, kind: input, shape index: {}]
  %s3 = inlined_call_operand.hbm [shape: f32[24,256], index: 3, kind: output, shape index: {}]
  %s4 = sld [smem:[#allocation0]]
  $region94: #{generator_forward.5} parent=0
    _
  %s6 = ssub.s32 1, %s4
  %s7 = scalar_select 0, %s6, %s4
  $region1: #{generator_forward.5} parent=0
    #allocation3 [shape = 'u8[196608]{0}', space=vmem, size = 0x30000, scoped, tag = 'input window, operand 1']
    #allocation4 [shape = 'u8[24576]{0}', space=vmem, size = 0x6000, scoped, tag = 'output window, operand 0']
    #allocation5 [shape = 's32[2]{0}', space=sflag, size = 0x8, scoped, tag = 'scoped memory for generator_forward.5']
    %8 = vsyncpa [#allocation5], 0
    %s9 = scalar_lea.sflag [#allocation5], 1
    %10 = vsyncpa %s9, 0
    loop: start=0, step=1, limit=4
    $region2: #{generator_forward.5} parent=1 // loop_pre_header
      _
    $region3: #{generator_forward.5} parent=1 // loop_header
      %s12 = sphi 0, %s16
      %p13 = scmp.ge.s32.totalorder %s12, 4
      %s19 = sphi 0, %s38
      %s20 = sphi 0, %s34
      %s21 = sphi 0, %s30
      %s22 = sphi 0, %s19
      %s23 = sphi 0, %s20
      %s24 = sphi 0, %s21
      %s25 = sphi 0, %s22
      %s26 = sphi 0, %s23
      %s27 = sphi 0, %s24
      %s43 = sphi 0, %s45
      %s46 = sphi 0, %s43
      %s47 = sphi 0, %s46
      %s63 = sphi 0, %s47
      %s71 = sphi 0, %s73
      %s74 = sphi 0, %s71
      %s75 = sphi 0, %s74
      %s91 = sphi 0, %s75
      %s97 = sphi 0, %s99
      %s100 = sphi 0, %s97
      %s101 = sphi 0, %s100
      %s117 = sphi 0, %s101
      %s125 = sphi 0, %s127
      %s128 = sphi 0, %s125
      %s129 = sphi 0, %s128
      %s145 = sphi 0, %s129
    $region4: #{generator_forward.5} parent=1 // loop_header_branch
      %15 = sbr.rel (%p13) target = $region8
    $region5: #{generator_forward.5} parent=1 // loop_body
      %s17 = ssub.s32 %s12, 1
      %s18 = ssub.s32 %s12, 2
      %s28 = sadd.s32 1, %s21
      %p29 = scmp.ge.s32.totalorder %s28, 1
      %s30 = scalar_select %p29, 0, %s28
      %s31 = sadd.s32 1, %s20
      %s32 = scalar_select %p29, %s31, %s20
      %p33 = scmp.ge.s32.totalorder %s32, 2
      %s34 = scalar_select %p33, 0, %s32
      %s35 = sadd.s32 1, %s19
      %s36 = scalar_select %p33, %s35, %s19
      %p37 = scmp.ge.s32.totalorder %s36, 1
      %s38 = scalar_select %p37, 0, %s36
      %s39 = ssub.s32 %s19, %s38
      %s40 = ssub.s32 %s21, %s30
      %s41 = sor.u32 %s39, %s40
      %p42 = scmp.eq.s32.totalorder %s41, 0
      %s44 = sadd.s32 %s43, 1
      %s45 = scalar_select %p42, %s43, %s44
      %p48 = pneg %p42
      %p49 = scmp.eq.s32.totalorder %s12, 1
      %p50 = por %p48, %p49
      %p51 = scmp.ne.s32.totalorder %s43, %s46
      %p52 = scmp.eq.s32.totalorder %s12, 0
      %p53 = por %p51, %p52
      %p54 = scmp.ne.s32.totalorder %s43, %s46
      %p55 = scmp.eq.s32.totalorder %s17, 1
      %p56 = por %p54, %p55
      %p57 = scmp.ne.s32.totalorder %s46, %s47
      %p58 = scmp.eq.s32.totalorder %s17, 0
      %p59 = por %p57, %p58
      %p60 = scmp.ne.s32.totalorder %s46, %s47
      %p61 = scmp.eq.s32.totalorder %s18, 1
      %p62 = por %p60, %p61
      %p64 = scmp.ne.s32.totalorder %s47, %s63
      %p65 = scmp.eq.s32.totalorder %s18, 0
      %p66 = por %p64, %p65
      %s67 = ssub.s32 %s21, %s30
      %s68 = ssub.s32 %s20, %s34
      %s69 = sor.u32 %s67, %s68
      %p70 = scmp.eq.s32.totalorder %s69, 0
      %s72 = sadd.s32 %s71, 1
      %s73 = scalar_select %p70, %s71, %s72
      %p76 = pneg %p70
      %p77 = scmp.eq.s32.totalorder %s12, 1
      %p78 = por %p76, %p77
      %p79 = scmp.ne.s32.totalorder %s71, %s74
      %p80 = scmp.eq.s32.totalorder %s12, 0
      %p81 = por %p79, %p80
      %p82 = scmp.ne.s32.totalorder %s71, %s74
      %p83 = scmp.eq.s32.totalorder %s17, 1
      %p84 = por %p82, %p83
      %p85 = scmp.ne.s32.totalorder %s74, %s75
      %p86 = scmp.eq.s32.totalorder %s17, 0
      %p87 = por %p85, %p86
      %p88 = scmp.ne.s32.totalorder %s74, %s75
      %p89 = scmp.eq.s32.totalorder %s18, 1
      %p90 = por %p88, %p89
      %p92 = scmp.ne.s32.totalorder %s75, %s91
      %p93 = scmp.eq.s32.totalorder %s18, 0
      %p94 = por %p92, %p93
      %s95 = ssub.s32 %s20, %s34
      %p96 = scmp.eq.s32.totalorder %s95, 0
      %s98 = sadd.s32 %s97, 1
      %s99 = scalar_select %p96, %s97, %s98
      %p102 = pneg %p96
      %p103 = scmp.eq.s32.totalorder %s12, 1
      %p104 = por %p102, %p103
      %p105 = scmp.ne.s32.totalorder %s97, %s100
      %p106 = scmp.eq.s32.totalorder %s12, 0
      %p107 = por %p105, %p106
      %p108 = scmp.ne.s32.totalorder %s97, %s100
      %p109 = scmp.eq.s32.totalorder %s17, 1
      %p110 = por %p108, %p109
      %p111 = scmp.ne.s32.totalorder %s100, %s101
      %p112 = scmp.eq.s32.totalorder %s17, 0
      %p113 = por %p111, %p112
      %p114 = scmp.ne.s32.totalorder %s100, %s101
      %p115 = scmp.eq.s32.totalorder %s18, 1
      %p116 = por %p114, %p115
      %p118 = scmp.ne.s32.totalorder %s101, %s117
      %p119 = scmp.eq.s32.totalorder %s18, 0
      %p120 = por %p118, %p119
      %s121 = ssub.s32 %s19, %s38
      %s122 = ssub.s32 %s20, %s34
      %s123 = sor.u32 %s121, %s122
      %p124 = scmp.eq.s32.totalorder %s123, 0
      %s126 = sadd.s32 %s125, 1
      %s127 = scalar_select %p124, %s125, %s126
      %p130 = pneg %p124
      %p131 = scmp.eq.s32.totalorder %s12, 1
      %p132 = por %p130, %p131
      %p133 = scmp.ne.s32.totalorder %s125, %s128
      %p134 = scmp.eq.s32.totalorder %s12, 0
      %p135 = por %p133, %p134
      %p136 = scmp.ne.s32.totalorder %s125, %s128
      %p137 = scmp.eq.s32.totalorder %s17, 1
      %p138 = por %p136, %p137
      %p139 = scmp.ne.s32.totalorder %s128, %s129
      %p140 = scmp.eq.s32.totalorder %s17, 0
      %p141 = por %p139, %p140
      %p142 = scmp.ne.s32.totalorder %s128, %s129
      %p143 = scmp.eq.s32.totalorder %s18, 1
      %p144 = por %p142, %p143
      %p146 = scmp.ne.s32.totalorder %s129, %s145
      %p147 = scmp.eq.s32.totalorder %s18, 0
      %p148 = por %p146, %p147
      %p149 = scmp.le.s32.totalorder 1, %s12
      %p150 = scmp.lt.s32.totalorder %s12, 3
      %p151 = pnand %p149, %p150
      %p152 = pneg %p151
      // Predicated region
      $region9: #{generator_forward.5} parent=5 // pred_check
        _
      $region10: #{generator_forward.5} parent=5 // pred_check_branch
        %154 = sbr.rel (%p151) target = $region12
      $region11: #{generator_forward.5} parent=5 // pred_region
        %s155 = ssub.s32 %s12, 1
        // Predicated region
        $region13: #{generator_forward.5} parent=11 // pred_check
          %p156 = pneg %p59
        $region14: #{generator_forward.5} parent=11 // pred_check_branch
          %158 = sbr.rel (%p156) target = $region16
        $region15: #{generator_forward.5} parent=11 // pred_region
          %s159 = smul.u32 3, %s22
          %s160 = smul.u32 3, %s24
          %p161 = scmp.lt.s32.totalorder %s159, 2
          %s162 = scalar_select %p161, %s159, 2
          %p163 = scmp.lt.s32.totalorder %s160, 2
          %s164 = scalar_select %p163, %s160, 2
          %s165 = smul.addr %s162, 3
          %s166 = sadd.s32 %s164, %s165
          %s167 = smul.addr %s166, 4
          %s168 = scalar_lea.vmem %s0, %s167
          %s169 = smul.u32 3, %s22
          %s170 = smul.u32 3, %s24
        $region16: #{generator_forward.5} parent=11 // pred_fallthru
          _
      $region12: #{generator_forward.5} parent=5 // pred_fallthru
        _
      %p171 = scmp.lt.s32.totalorder %s12, 2
      // Predicated region
      $region17: #{generator_forward.5} parent=5 // pred_check
        %p172 = pneg %p171
      $region18: #{generator_forward.5} parent=5 // pred_check_branch
        %174 = sbr.rel (%p172) target = $region20
      $region19: #{generator_forward.5} parent=5 // pred_region
        // Predicated region
        $region21: #{generator_forward.5} parent=19 // pred_check
          %p175 = pneg %p81
        $region22: #{generator_forward.5} parent=19 // pred_check_branch
          %177 = sbr.rel (%p175) target = $region24
        $region23: #{generator_forward.5} parent=19 // pred_region
          %s178 = sand.u32 %s71, 1
          %s179 = sand.u32 %s71, 1
          %s180 = smul.addr %s179, 192
          %s181 = scalar_lea.vmem [#allocation3], %s180
          %s182 = smul.u32 48, %s21
          %s183 = smul.addr %s182, 2
          %s184 = sadd.s32 %s20, %s183
          %s185 = smul.addr %s184, 4
          %s186 = scalar_lea.vmem %s1, %s185
          // Predicated region
          $region25: #{generator_forward.5} parent=23 // pred_check
            _
          $region26: #{generator_forward.5} parent=23 // pred_check_branch
            %188 = sbr.rel (0) target = $region28
          $region27: #{generator_forward.5} parent=23 // pred_region
            // Predicated region
            $region29: #{generator_forward.5} parent=27 // pred_check
              _
            $region30: #{generator_forward.5} parent=27 // pred_check_branch
              %190 = sbr.rel target = $region32
            $region31: #{generator_forward.5} parent=27 // pred_region
              // Predicated region
              $region44: #{generator_forward.5} parent=31 // pred_check
                _
              $region45: #{generator_forward.5} parent=31 // pred_check_branch
                %299 = sbr.rel (0) target = $region47
              $region46: #{generator_forward.5} parent=31 // pred_region
                loop: start=0, step=1, limit=1
                $region48: #{generator_forward.5} parent=46 // loop_pre_header
                  _
                $region49: #{generator_forward.5} parent=46 // loop_header
                  %s301 = sphi 0, %s305
                  %p302 = scmp.ge.s32.totalorder %s301, 1
                  %s306 = sphi %s186, %s186
                  %s307 = sphi %s181, %s181
                $region50: #{generator_forward.5} parent=46 // loop_header_branch
                  %304 = sbr.rel (%p302) target = $region54
                $region51: #{generator_forward.5} parent=46 // loop_body
                  _
                $region52: #{generator_forward.5} parent=46 // loop_footer
                  %s305 = sadd.s32 1, %s301
                $region53: #{generator_forward.5} parent=46 // loop_footer_branch
                  %300 = sbr.rel target = $region49
                $region54: #{generator_forward.5} parent=46 // loop_exit
                  _
                loop: start=0, step=1, limit=1
                $region55: #{generator_forward.5} parent=46 // loop_pre_header
                  _
                $region56: #{generator_forward.5} parent=46 // loop_header
                  %s310 = sphi 0, %s314
                  %p311 = scmp.ge.s32.totalorder %s310, 1
                  %s315 = sphi %s186, %s186
                  %s316 = sphi %s181, %s181
                $region57: #{generator_forward.5} parent=46 // loop_header_branch
                  %313 = sbr.rel (%p311) target = $region61
                $region58: #{generator_forward.5} parent=46 // loop_body
                  %v317 = vld [vmem:[%s315] sm:$0xf]
                  %318 = vst [vmem:[%s316] sm:$0xf] %v317
                  %v319 = vld [vmem:[%s315 + $0x8] sm:$0xf]
                  %320 = vst [vmem:[%s316 + $0x4] sm:$0xf] %v319
                  %v321 = vld [vmem:[%s315 + $0x10] sm:$0xf]
                  %322 = vst [vmem:[%s316 + $0x8] sm:$0xf] %v321
                  %v323 = vld [vmem:[%s315 + $0x18] sm:$0xf]
                  %324 = vst [vmem:[%s316 + $0xc] sm:$0xf] %v323
                  %v325 = vld [vmem:[%s315 + $0x20] sm:$0xf]
                  %326 = vst [vmem:[%s316 + $0x10] sm:$0xf] %v325
                  %v327 = vld [vmem:[%s315 + $0x28] sm:$0xf]
                  %328 = vst [vmem:[%s316 + $0x14] sm:$0xf] %v327
                  %v329 = vld [vmem:[%s315 + $0x30] sm:$0xf]
                  %330 = vst [vmem:[%s316 + $0x18] sm:$0xf] %v329
                  %v331 = vld [vmem:[%s315 + $0x38] sm:$0xf]
                  %332 = vst [vmem:[%s316 + $0x1c] sm:$0xf] %v331
                  %v333 = vld [vmem:[%s315 + $0x40] sm:$0xf]
                  %334 = vst [vmem:[%s316 + $0x20] sm:$0xf] %v333
                  %v335 = vld [vmem:[%s315 + $0x48] sm:$0xf]
                  %336 = vst [vmem:[%s316 + $0x24] sm:$0xf] %v335
                  %v337 = vld [vmem:[%s315 + $0x50] sm:$0xf]
                  %338 = vst [vmem:[%s316 + $0x28] sm:$0xf] %v337
                  %v339 = vld [vmem:[%s315 + $0x58] sm:$0xf]
                  %340 = vst [vmem:[%s316 + $0x2c] sm:$0xf] %v339
                  %v341 = vld [vmem:[%s315 + $0x60] sm:$0xf]
                  %342 = vst [vmem:[%s316 + $0x30] sm:$0xf] %v341
                  %v343 = vld [vmem:[%s315 + $0x68] sm:$0xf]
                  %344 = vst [vmem:[%s316 + $0x34] sm:$0xf] %v343
                  %v345 = vld [vmem:[%s315 + $0x70] sm:$0xf]
                  %346 = vst [vmem:[%s316 + $0x38] sm:$0xf] %v345
                  %v347 = vld [vmem:[%s315 + $0x78] sm:$0xf]
                  %348 = vst [vmem:[%s316 + $0x3c] sm:$0xf] %v347
                  %v349 = vld [vmem:[%s315 + $0x80] sm:$0xf]
                  %350 = vst [vmem:[%s316 + $0x40] sm:$0xf] %v349
                  %v351 = vld [vmem:[%s315 + $0x88] sm:$0xf]
                  %352 = vst [vmem:[%s316 + $0x44] sm:$0xf] %v351
                  %v353 = vld [vmem:[%s315 + $0x90] sm:$0xf]
                  %354 = vst [vmem:[%s316 + $0x48] sm:$0xf] %v353
                  %v355 = vld [vmem:[%s315 + $0x98] sm:$0xf]
                  %356 = vst [vmem:[%s316 + $0x4c] sm:$0xf] %v355
                  %v357 = vld [vmem:[%s315 + $0xa0] sm:$0xf]
                  %358 = vst [vmem:[%s316 + $0x50] sm:$0xf] %v357
                  %v359 = vld [vmem:[%s315 + $0xa8] sm:$0xf]
                  %360 = vst [vmem:[%s316 + $0x54] sm:$0xf] %v359
                  %v361 = vld [vmem:[%s315 + $0xb0] sm:$0xf]
                  %362 = vst [vmem:[%s316 + $0x58] sm:$0xf] %v361
                  %v363 = vld [vmem:[%s315 + $0xb8] sm:$0xf]
                  %364 = vst [vmem:[%s316 + $0x5c] sm:$0xf] %v363
                  %v365 = vld [vmem:[%s315 + $0xc0] sm:$0xf]
                  %366 = vst [vmem:[%s316 + $0x60] sm:$0xf] %v365
                  %v367 = vld [vmem:[%s315 + $0xc8] sm:$0xf]
                  %368 = vst [vmem:[%s316 + $0x64] sm:$0xf] %v367
                  %v369 = vld [vmem:[%s315 + $0xd0] sm:$0xf]
                  %370 = vst [vmem:[%s316 + $0x68] sm:$0xf] %v369
                  %v371 = vld [vmem:[%s315 + $0xd8] sm:$0xf]
                  %372 = vst [vmem:[%s316 + $0x6c] sm:$0xf] %v371
                  %v373 = vld [vmem:[%s315 + $0xe0] sm:$0xf]
                  %374 = vst [vmem:[%s316 + $0x70] sm:$0xf] %v373
                  %v375 = vld [vmem:[%s315 + $0xe8] sm:$0xf]
                  %376 = vst [vmem:[%s316 + $0x74] sm:$0xf] %v375
                  %v377 = vld [vmem:[%s315 + $0xf0] sm:$0xf]
                  %378 = vst [vmem:[%s316 + $0x78] sm:$0xf] %v377
                  %v379 = vld [vmem:[%s315 + $0xf8] sm:$0xf]
                  %380 = vst [vmem:[%s316 + $0x7c] sm:$0xf] %v379
                  %v381 = vld [vmem:[%s315 + $0x100] sm:$0xf]
                  %382 = vst [vmem:[%s316 + $0x80] sm:$0xf] %v381
                  %v383 = vld [vmem:[%s315 + $0x108] sm:$0xf]
                  %384 = vst [vmem:[%s316 + $0x84] sm:$0xf] %v383
                  %v385 = vld [vmem:[%s315 + $0x110] sm:$0xf]
                  %386 = vst [vmem:[%s316 + $0x88] sm:$0xf] %v385
                  %v387 = vld [vmem:[%s315 + $0x118] sm:$0xf]
                  %388 = vst [vmem:[%s316 + $0x8c] sm:$0xf] %v387
                  %v389 = vld [vmem:[%s315 + $0x120] sm:$0xf]
                  %390 = vst [vmem:[%s316 + $0x90] sm:$0xf] %v389
                  %v391 = vld [vmem:[%s315 + $0x128] sm:$0xf]
                  %392 = vst [vmem:[%s316 + $0x94] sm:$0xf] %v391
                  %v393 = vld [vmem:[%s315 + $0x130] sm:$0xf]
                  %394 = vst [vmem:[%s316 + $0x98] sm:$0xf] %v393
                  %v395 = vld [vmem:[%s315 + $0x138] sm:$0xf]
                  %396 = vst [vmem:[%s316 + $0x9c] sm:$0xf] %v395
                  %v397 = vld [vmem:[%s315 + $0x140] sm:$0xf]
                  %398 = vst [vmem:[%s316 + $0xa0] sm:$0xf] %v397
                  %v399 = vld [vmem:[%s315 + $0x148] sm:$0xf]
                  %400 = vst [vmem:[%s316 + $0xa4] sm:$0xf] %v399
                  %v401 = vld [vmem:[%s315 + $0x150] sm:$0xf]
                  %402 = vst [vmem:[%s316 + $0xa8] sm:$0xf] %v401
                  %v403 = vld [vmem:[%s315 + $0x158] sm:$0xf]
                  %404 = vst [vmem:[%s316 + $0xac] sm:$0xf] %v403
                  %v405 = vld [vmem:[%s315 + $0x160] sm:$0xf]
                  %406 = vst [vmem:[%s316 + $0xb0] sm:$0xf] %v405
                  %v407 = vld [vmem:[%s315 + $0x168] sm:$0xf]
                  %408 = vst [vmem:[%s316 + $0xb4] sm:$0xf] %v407
                  %v409 = vld [vmem:[%s315 + $0x170] sm:$0xf]
                  %410 = vst [vmem:[%s316 + $0xb8] sm:$0xf] %v409
                  %v411 = vld [vmem:[%s315 + $0x178] sm:$0xf]
                  %412 = vst [vmem:[%s316 + $0xbc] sm:$0xf] %v411
                $region59: #{generator_forward.5} parent=46 // loop_footer
                  %s314 = sadd.s32 1, %s310
                $region60: #{generator_forward.5} parent=46 // loop_footer_branch
                  %309 = sbr.rel target = $region56
                $region61: #{generator_forward.5} parent=46 // loop_exit
                  _
              $region47: #{generator_forward.5} parent=31 // pred_fallthru
                _
            $region32: #{generator_forward.5} parent=27 // pred_fallthru
              _
            // Predicated region
            $region33: #{generator_forward.5} parent=27 // pred_check
              _
            $region34: #{generator_forward.5} parent=27 // pred_check_branch
              %192 = sbr.rel (0) target = $region36
            $region35: #{generator_forward.5} parent=27 // pred_region
              loop: start=0, step=1, limit=1
              $region37: #{generator_forward.5} parent=35 // loop_pre_header
                _
              $region38: #{generator_forward.5} parent=35 // loop_header
                %s195 = sphi 0, %s199
                %p196 = scmp.ge.s32.totalorder %s195, 1
                %s200 = sphi %s186, %s186
                %s201 = sphi %s181, %s181
              $region39: #{generator_forward.5} parent=35 // loop_header_branch
                %198 = sbr.rel (%p196) target = $region43
              $region40: #{generator_forward.5} parent=35 // loop_body
                %v202 = vld [vmem:[%s200] sm:$0xf]
                %203 = vst [vmem:[%s201] sm:$0xf] %v202
                %v204 = vld [vmem:[%s200 + $0x8] sm:$0xf]
                %205 = vst [vmem:[%s201 + $0x4] sm:$0xf] %v204
                %v206 = vld [vmem:[%s200 + $0x10] sm:$0xf]
                %207 = vst [vmem:[%s201 + $0x8] sm:$0xf] %v206
                %v208 = vld [vmem:[%s200 + $0x18] sm:$0xf]
                %209 = vst [vmem:[%s201 + $0xc] sm:$0xf] %v208
                %v210 = vld [vmem:[%s200 + $0x20] sm:$0xf]
                %211 = vst [vmem:[%s201 + $0x10] sm:$0xf] %v210
                %v212 = vld [vmem:[%s200 + $0x28] sm:$0xf]
                %213 = vst [vmem:[%s201 + $0x14] sm:$0xf] %v212
                %v214 = vld [vmem:[%s200 + $0x30] sm:$0xf]
                %215 = vst [vmem:[%s201 + $0x18] sm:$0xf] %v214
                %v216 = vld [vmem:[%s200 + $0x38] sm:$0xf]
                %217 = vst [vmem:[%s201 + $0x1c] sm:$0xf] %v216
                %v218 = vld [vmem:[%s200 + $0x40] sm:$0xf]
                %219 = vst [vmem:[%s201 + $0x20] sm:$0xf] %v218
                %v220 = vld [vmem:[%s200 + $0x48] sm:$0xf]
                %221 = vst [vmem:[%s201 + $0x24] sm:$0xf] %v220
                %v222 = vld [vmem:[%s200 + $0x50] sm:$0xf]
                %223 = vst [vmem:[%s201 + $0x28] sm:$0xf] %v222
                %v224 = vld [vmem:[%s200 + $0x58] sm:$0xf]
                %225 = vst [vmem:[%s201 + $0x2c] sm:$0xf] %v224
                %v226 = vld [vmem:[%s200 + $0x60] sm:$0xf]
                %227 = vst [vmem:[%s201 + $0x30] sm:$0xf] %v226
                %v228 = vld [vmem:[%s200 + $0x68] sm:$0xf]
                %229 = vst [vmem:[%s201 + $0x34] sm:$0xf] %v228
                %v230 = vld [vmem:[%s200 + $0x70] sm:$0xf]
                %231 = vst [vmem:[%s201 + $0x38] sm:$0xf] %v230
                %v232 = vld [vmem:[%s200 + $0x78] sm:$0xf]
                %233 = vst [vmem:[%s201 + $0x3c] sm:$0xf] %v232
                %v234 = vld [vmem:[%s200 + $0x80] sm:$0xf]
                %235 = vst [vmem:[%s201 + $0x40] sm:$0xf] %v234
                %v236 = vld [vmem:[%s200 + $0x88] sm:$0xf]
                %237 = vst [vmem:[%s201 + $0x44] sm:$0xf] %v236
                %v238 = vld [vmem:[%s200 + $0x90] sm:$0xf]
                %239 = vst [vmem:[%s201 + $0x48] sm:$0xf] %v238
                %v240 = vld [vmem:[%s200 + $0x98] sm:$0xf]
                %241 = vst [vmem:[%s201 + $0x4c] sm:$0xf] %v240
                %v242 = vld [vmem:[%s200 + $0xa0] sm:$0xf]
                %243 = vst [vmem:[%s201 + $0x50] sm:$0xf] %v242
                %v244 = vld [vmem:[%s200 + $0xa8] sm:$0xf]
                %245 = vst [vmem:[%s201 + $0x54] sm:$0xf] %v244
                %v246 = vld [vmem:[%s200 + $0xb0] sm:$0xf]
                %247 = vst [vmem:[%s201 + $0x58] sm:$0xf] %v246
                %v248 = vld [vmem:[%s200 + $0xb8] sm:$0xf]
                %249 = vst [vmem:[%s201 + $0x5c] sm:$0xf] %v248
                %v250 = vld [vmem:[%s200 + $0xc0] sm:$0xf]
                %251 = vst [vmem:[%s201 + $0x60] sm:$0xf] %v250
                %v252 = vld [vmem:[%s200 + $0xc8] sm:$0xf]
                %253 = vst [vmem:[%s201 + $0x64] sm:$0xf] %v252
                %v254 = vld [vmem:[%s200 + $0xd0] sm:$0xf]
                %255 = vst [vmem:[%s201 + $0x68] sm:$0xf] %v254
                %v256 = vld [vmem:[%s200 + $0xd8] sm:$0xf]
                %257 = vst [vmem:[%s201 + $0x6c] sm:$0xf] %v256
                %v258 = vld [vmem:[%s200 + $0xe0] sm:$0xf]
                %259 = vst [vmem:[%s201 + $0x70] sm:$0xf] %v258
                %v260 = vld [vmem:[%s200 + $0xe8] sm:$0xf]
                %261 = vst [vmem:[%s201 + $0x74] sm:$0xf] %v260
                %v262 = vld [vmem:[%s200 + $0xf0] sm:$0xf]
                %263 = vst [vmem:[%s201 + $0x78] sm:$0xf] %v262
                %v264 = vld [vmem:[%s200 + $0xf8] sm:$0xf]
                %265 = vst [vmem:[%s201 + $0x7c] sm:$0xf] %v264
                %v266 = vld [vmem:[%s200 + $0x100] sm:$0xf]
                %267 = vst [vmem:[%s201 + $0x80] sm:$0xf] %v266
                %v268 = vld [vmem:[%s200 + $0x108] sm:$0xf]
                %269 = vst [vmem:[%s201 + $0x84] sm:$0xf] %v268
                %v270 = vld [vmem:[%s200 + $0x110] sm:$0xf]
                %271 = vst [vmem:[%s201 + $0x88] sm:$0xf] %v270
                %v272 = vld [vmem:[%s200 + $0x118] sm:$0xf]
                %273 = vst [vmem:[%s201 + $0x8c] sm:$0xf] %v272
                %v274 = vld [vmem:[%s200 + $0x120] sm:$0xf]
                %275 = vst [vmem:[%s201 + $0x90] sm:$0xf] %v274
                %v276 = vld [vmem:[%s200 + $0x128] sm:$0xf]
                %277 = vst [vmem:[%s201 + $0x94] sm:$0xf] %v276
                %v278 = vld [vmem:[%s200 + $0x130] sm:$0xf]
                %279 = vst [vmem:[%s201 + $0x98] sm:$0xf] %v278
                %v280 = vld [vmem:[%s200 + $0x138] sm:$0xf]
                %281 = vst [vmem:[%s201 + $0x9c] sm:$0xf] %v280
                %v282 = vld [vmem:[%s200 + $0x140] sm:$0xf]
                %283 = vst [vmem:[%s201 + $0xa0] sm:$0xf] %v282
                %v284 = vld [vmem:[%s200 + $0x148] sm:$0xf]
                %285 = vst [vmem:[%s201 + $0xa4] sm:$0xf] %v284
                %v286 = vld [vmem:[%s200 + $0x150] sm:$0xf]
                %287 = vst [vmem:[%s201 + $0xa8] sm:$0xf] %v286
                %v288 = vld [vmem:[%s200 + $0x158] sm:$0xf]
                %289 = vst [vmem:[%s201 + $0xac] sm:$0xf] %v288
                %v290 = vld [vmem:[%s200 + $0x160] sm:$0xf]
                %291 = vst [vmem:[%s201 + $0xb0] sm:$0xf] %v290
                %v292 = vld [vmem:[%s200 + $0x168] sm:$0xf]
                %293 = vst [vmem:[%s201 + $0xb4] sm:$0xf] %v292
                %v294 = vld [vmem:[%s200 + $0x170] sm:$0xf]
                %295 = vst [vmem:[%s201 + $0xb8] sm:$0xf] %v294
                %v296 = vld [vmem:[%s200 + $0x178] sm:$0xf]
                %297 = vst [vmem:[%s201 + $0xbc] sm:$0xf] %v296
              $region41: #{generator_forward.5} parent=35 // loop_footer
                %s199 = sadd.s32 1, %s195
              $region42: #{generator_forward.5} parent=35 // loop_footer_branch
                %194 = sbr.rel target = $region38
              $region43: #{generator_forward.5} parent=35 // loop_exit
                _
            $region36: #{generator_forward.5} parent=27 // pred_fallthru
              _
          $region28: #{generator_forward.5} parent=23 // pred_fallthru
            _
          %413 = vnop
        $region24: #{generator_forward.5} parent=19 // pred_fallthru
          _
        // Predicated region
        $region62: #{generator_forward.5} parent=19 // pred_check
          %p414 = pneg %p107
        $region63: #{generator_forward.5} parent=19 // pred_check_branch
          %416 = sbr.rel (%p414) target = $region65
        $region64: #{generator_forward.5} parent=19 // pred_region
          %p417 = scmp.lt.s32.totalorder %s20, 1
          %s418 = scalar_select %p417, %s20, 1
          %s419 = scalar_lea.vmem %s2, %s418
        $region65: #{generator_forward.5} parent=19 // pred_fallthru
          _
      $region20: #{generator_forward.5} parent=5 // pred_fallthru
        _
      %p420 = scmp.le.s32.totalorder 1, %s12
      %p421 = scmp.lt.s32.totalorder %s12, 3
      %p422 = pnand %p420, %p421
      %p423 = pneg %p422
      // Predicated region
      $region66: #{generator_forward.5} parent=5 // pred_check
        _
      $region67: #{generator_forward.5} parent=5 // pred_check_branch
        %425 = sbr.rel (%p422) target = $region69
      $region68: #{generator_forward.5} parent=5 // pred_region
        %s426 = ssub.s32 %s12, 1
        %s427 = sand.u32 %s74, 1
        %s428 = sand.u32 %s74, 1
        %s429 = smul.addr %s428, 192
        %s430 = scalar_lea.vmem [#allocation3], %s429
        // Predicated region
        $region70: #{generator_forward.5} parent=68 // pred_check
          %p431 = pneg %p87
        $region71: #{generator_forward.5} parent=68 // pred_check_branch
          %433 = sbr.rel (%p431) target = $region73
        $region72: #{generator_forward.5} parent=68 // pred_region
          _
        $region73: #{generator_forward.5} parent=68 // pred_fallthru
          _
        %s434 = smul.u32 3, %s22
        %s435 = smul.u32 3, %s24
        %p436 = scmp.lt.s32.totalorder %s434, 2
        %s437 = scalar_select %p436, %s434, 2
        %p438 = scmp.lt.s32.totalorder %s435, 2
        %s439 = scalar_select %p438, %s435, 2
        %s440 = smul.addr %s437, 3
        %s441 = sadd.s32 %s439, %s440
        %s442 = smul.addr %s441, 4
        %s443 = scalar_lea.vmem %s0, %s442
        %p444 = pneg %p59
        %p445 = pneg %p56
        %s446 = sand.u32 %s74, 1
        %s447 = sand.u32 %s74, 1
        %s448 = smul.addr %s447, 192
        %s449 = scalar_lea.vmem [#allocation3], %s448
        %p450 = pneg %p87
        %p451 = pneg %p84
        %p452 = scmp.lt.s32.totalorder %s23, 1
        %s453 = scalar_select %p452, %s23, 1
        %s454 = scalar_lea.vmem %s2, %s453
        %p455 = pneg %p113
        %p456 = pneg %p110
        %p457 = pneg %p141
        %p458 = pneg %p138
        %s459 = sand.u32 %s128, 1
        %s460 = scalar_lea.sflag [#allocation5], %s459
        %s461 = sand.u32 %s128, 1
        %s462 = smul.addr %s461, 24
        %s463 = scalar_lea.vmem [#allocation4], %s462
        %s464 = smul.u32 3, %s22
        %s465 = smul.u32 3, %s24
        %p466 = scmp.lt.s32.totalorder %s464, 2
        %s467 = scalar_select %p466, %s464, 2
        %p468 = scmp.lt.s32.totalorder %s465, 2
        %s469 = scalar_select %p468, %s465, 2
        %s470 = smul.addr %s467, 3
        %s471 = sadd.s32 %s469, %s470
        %s472 = smul.addr %s471, 4
        %s473 = scalar_lea.vmem %s0, %s472
        %s474 = smul.u32 3, %s22
        %s475 = smul.u32 3, %s24
        %s476 = smul.u32 48, %s24
        %p477 = scmp.lt.s32.totalorder %s23, 1
        %s478 = scalar_select %p477, %s23, 1
        %s479 = scalar_lea.vmem %s2, %s478
        %s480 = smul.u32 3, %s22
        %p482 = scmp.eq.s32.totalorder %s24, 0
        // Predicated region
        $region74: #{generator_forward.5} parent=68 // pred_check
          %p483 = pneg %p482
        $region75: #{generator_forward.5} parent=68 // pred_check_branch
          %485 = sbr.rel (%p483) target = $region77
        $region76: #{generator_forward.5} parent=68 // pred_region
          %486 = vst [vmem:[#allocation2] sm:$0xff] 0.0
          %487 = vst [vmem:[#allocation2 + $0x8] sm:$0xff] 0.0
          %488 = vst [vmem:[#allocation2 + $0x10] sm:$0xff] 0.0
        $region77: #{generator_forward.5} parent=68 // pred_fallthru
          _
        %v489 = vld [vmem:[#allocation2] sm:$0xff]
        %v490 = vld [vmem:[#allocation2 + $0x8] sm:$0xff]
        %v491 = vld [vmem:[#allocation2 + $0x10] sm:$0xff]
        %v492 = vld [vmem:[%s473] sm:$0xff]
        %v493 = vld [vmem:[%s473 + $0x8] sm:$0xf]
        %v494 = vld [vmem:[%s473 + $0xc] sm:$0xff]
        %v495 = vld [vmem:[%s473 + $0x14] sm:$0xf]
        %v496 = vld [vmem:[%s473 + $0x18] sm:$0xff]
        %v497 = vld [vmem:[%s473 + $0x20] sm:$0xf]
        %v498 = vld [vmem:[%s430] sm:$0xf]
        %v499 = vld [vmem:[%s430 + $0x4] sm:$0xf]
        %v500 = vld [vmem:[%s430 + $0x8] sm:$0xf]
        %v501 = vld [vmem:[%s430 + $0xc] sm:$0xf]
        %v502 = vld [vmem:[%s430 + $0x10] sm:$0xf]
        %v503 = vld [vmem:[%s430 + $0x14] sm:$0xf]
        %v504 = vld [vmem:[%s430 + $0x18] sm:$0xf]
        %v505 = vld [vmem:[%s430 + $0x1c] sm:$0xf]
        %v506 = vld [vmem:[%s430 + $0x20] sm:$0xf]
        %v507 = vld [vmem:[%s430 + $0x24] sm:$0xf]
        %v508 = vld [vmem:[%s430 + $0x28] sm:$0xf]
        %v509 = vld [vmem:[%s430 + $0x2c] sm:$0xf]
        %v510 = vld [vmem:[%s430 + $0x30] sm:$0xf]
        %v511 = vld [vmem:[%s430 + $0x34] sm:$0xf]
        %v512 = vld [vmem:[%s430 + $0x38] sm:$0xf]
        %v513 = vld [vmem:[%s430 + $0x3c] sm:$0xf]
        %v514 = vld [vmem:[%s430 + $0x40] sm:$0xf]
        %v515 = vld [vmem:[%s430 + $0x44] sm:$0xf]
        %v516 = vld [vmem:[%s430 + $0x48] sm:$0xf]
        %v517 = vld [vmem:[%s430 + $0x4c] sm:$0xf]
        %v518 = vld [vmem:[%s430 + $0x50] sm:$0xf]
        %v519 = vld [vmem:[%s430 + $0x54] sm:$0xf]
        %v520 = vld [vmem:[%s430 + $0x58] sm:$0xf]
        %v521 = vld [vmem:[%s430 + $0x5c] sm:$0xf]
        %v522 = vld [vmem:[%s430 + $0x60] sm:$0xf]
        %v523 = vld [vmem:[%s430 + $0x64] sm:$0xf]
        %v524 = vld [vmem:[%s430 + $0x68] sm:$0xf]
        %v525 = vld [vmem:[%s430 + $0x6c] sm:$0xf]
        %v526 = vld [vmem:[%s430 + $0x70] sm:$0xf]
        %v527 = vld [vmem:[%s430 + $0x74] sm:$0xf]
        %v528 = vld [vmem:[%s430 + $0x78] sm:$0xf]
        %v529 = vld [vmem:[%s430 + $0x7c] sm:$0xf]
        %v530 = vld [vmem:[%s430 + $0x80] sm:$0xf]
        %v531 = vld [vmem:[%s430 + $0x84] sm:$0xf]
        %v532 = vld [vmem:[%s430 + $0x88] sm:$0xf]
        %v533 = vld [vmem:[%s430 + $0x8c] sm:$0xf]
        %v534 = vld [vmem:[%s430 + $0x90] sm:$0xf]
        %v535 = vld [vmem:[%s430 + $0x94] sm:$0xf]
        %v536 = vld [vmem:[%s430 + $0x98] sm:$0xf]
        %v537 = vld [vmem:[%s430 + $0x9c] sm:$0xf]
        %v538 = vld [vmem:[%s430 + $0xa0] sm:$0xf]
        %v539 = vld [vmem:[%s430 + $0xa4] sm:$0xf]
        %v540 = vld [vmem:[%s430 + $0xa8] sm:$0xf]
        %v541 = vld [vmem:[%s430 + $0xac] sm:$0xf]
        %v542 = vld [vmem:[%s430 + $0xb0] sm:$0xf]
        %v543 = vld [vmem:[%s430 + $0xb4] sm:$0xf]
        %v544 = vld [vmem:[%s430 + $0xb8] sm:$0xf]
        %v545 = vld [vmem:[%s430 + $0xbc] sm:$0xf]
        %v552 = vunpack.c.l.b16 %v492
        %v553 = vunpack.c.h.b16 %v492
        %v554 = vunpack.c.l.b16 %v493
        %v555 = vunpack.c.l.b16 %v494
        %v556 = vunpack.c.h.b16 %v494
        %v557 = vunpack.c.l.b16 %v495
        %v558 = vunpack.c.l.b16 %v496
        %v559 = vunpack.c.h.b16 %v496
        %v560 = vunpack.c.l.b16 %v497
        %v561 = vpack.c.b16 %v555, %v552
        %v562 = vpack.c.b16 %v556, %v553
        %v563 = vpack.c.b16 %v557, %v554
        %v564 = vpack.c.b16 %v558, %v558
        %v565 = vpack.c.b16 %v559, %v559
        %v566 = vpack.c.b16 %v560, %v560
        %v621 = vunpack.c.l.b16 %v498
        %v622 = vunpack.c.l.b16 %v499
        %v623 = vunpack.c.l.b16 %v500
        %v624 = vunpack.c.l.b16 %v501
        %v625 = vunpack.c.l.b16 %v502
        %v626 = vunpack.c.l.b16 %v503
        %v627 = vunpack.c.l.b16 %v504
        %v628 = vunpack.c.l.b16 %v505
        %v629 = vunpack.c.l.b16 %v506
        %v630 = vunpack.c.l.b16 %v507
        %v631 = vunpack.c.l.b16 %v508
        %v632 = vunpack.c.l.b16 %v509
        %v633 = vunpack.c.l.b16 %v510
        %v634 = vunpack.c.l.b16 %v511
        %v635 = vunpack.c.l.b16 %v512
        %v636 = vunpack.c.l.b16 %v513
        %v637 = vunpack.c.l.b16 %v514
        %v638 = vunpack.c.l.b16 %v515
        %v639 = vunpack.c.l.b16 %v516
        %v640 = vunpack.c.l.b16 %v517
        %v641 = vunpack.c.l.b16 %v518
        %v642 = vunpack.c.l.b16 %v519
        %v643 = vunpack.c.l.b16 %v520
        %v644 = vunpack.c.l.b16 %v521
        %v645 = vunpack.c.l.b16 %v522
        %v646 = vunpack.c.l.b16 %v523
        %v647 = vunpack.c.l.b16 %v524
        %v648 = vunpack.c.l.b16 %v525
        %v649 = vunpack.c.l.b16 %v526
        %v650 = vunpack.c.l.b16 %v527
        %v651 = vunpack.c.l.b16 %v528
        %v652 = vunpack.c.l.b16 %v529
        %v653 = vunpack.c.l.b16 %v530
        %v654 = vunpack.c.l.b16 %v531
        %v655 = vunpack.c.l.b16 %v532
        %v656 = vunpack.c.l.b16 %v533
        %v657 = vunpack.c.l.b16 %v534
        %v658 = vunpack.c.l.b16 %v535
        %v659 = vunpack.c.l.b16 %v536
        %v660 = vunpack.c.l.b16 %v537
        %v661 = vunpack.c.l.b16 %v538
        %v662 = vunpack.c.l.b16 %v539
        %v663 = vunpack.c.l.b16 %v540
        %v664 = vunpack.c.l.b16 %v541
        %v665 = vunpack.c.l.b16 %v542
        %v666 = vunpack.c.l.b16 %v543
        %v667 = vunpack.c.l.b16 %v544
        %v668 = vunpack.c.l.b16 %v545
        %v669 = vpack.c.b16 %v622, %v621
        %v670 = vpack.c.b16 %v624, %v623
        %v671 = vpack.c.b16 %v626, %v625
        %v672 = vpack.c.b16 %v628, %v627
        %v673 = vpack.c.b16 %v630, %v629
        %v674 = vpack.c.b16 %v632, %v631
        %v675 = vpack.c.b16 %v634, %v633
        %v676 = vpack.c.b16 %v636, %v635
        %v677 = vpack.c.b16 %v638, %v637
        %v678 = vpack.c.b16 %v640, %v639
        %v679 = vpack.c.b16 %v642, %v641
        %v680 = vpack.c.b16 %v644, %v643
        %v681 = vpack.c.b16 %v646, %v645
        %v682 = vpack.c.b16 %v648, %v647
        %v683 = vpack.c.b16 %v650, %v649
        %v684 = vpack.c.b16 %v652, %v651
        %v685 = vpack.c.b16 %v654, %v653
        %v686 = vpack.c.b16 %v656, %v655
        %v687 = vpack.c.b16 %v658, %v657
        %v688 = vpack.c.b16 %v660, %v659
        %v689 = vpack.c.b16 %v662, %v661
        %v690 = vpack.c.b16 %v664, %v663
        %v691 = vpack.c.b16 %v666, %v665
        %v692 = vpack.c.b16 %v668, %v667
        %717 = vmatprep.subr.bf16.mxu0 0
        %718 = vmatpush1.bf16.msra.mxu0 %v669
        %719 = vmatprep.subr.bf16.mxu0 0
        %720 = vmatpush1.bf16.msra.mxu0 %v670
        %721 = vmatprep.subr.bf16.mxu0 0
        %722 = vmatpush1.bf16.msra.mxu0 %v671
        %723 = vmatprep.subr.bf16.mxu0 0
        %724 = vmatpush1.bf16.msra.mxu0 %v672
        %725 = vmatprep.subr.bf16.mxu0 0
        %726 = vmatpush1.bf16.msra.mxu0 %v673
        %727 = vmatprep.subr.bf16.mxu0 0
        %728 = vmatpush1.bf16.msra.mxu0 %v674
        %729 = vmatprep.subr.bf16.mxu0 0
        %730 = vmatpush1.bf16.msra.mxu0 %v675
        %731 = vmatprep.subr.bf16.mxu0 0
        %732 = vmatpush1.bf16.msra.mxu0 %v676
        %733 = vmatprep.subr.bf16.mxu0 0
        %734 = vmatpush1.bf16.msra.mxu0 %v677
        %735 = vmatprep.subr.bf16.mxu0 0
        %736 = vmatpush1.bf16.msra.mxu0 %v678
        %737 = vmatprep.subr.bf16.mxu0 0
        %738 = vmatpush1.bf16.msra.mxu0 %v679
        %739 = vmatprep.subr.bf16.mxu0 0
        %740 = vmatpush1.bf16.msra.mxu0 %v680
        %741 = vmatprep.subr.bf16.mxu0 0
        %742 = vmatpush1.bf16.msra.mxu0 %v681
        %743 = vmatprep.subr.bf16.mxu0 0
        %744 = vmatpush1.bf16.msra.mxu0 %v682
        %745 = vmatprep.subr.bf16.mxu0 0
        %746 = vmatpush1.bf16.msra.mxu0 %v683
        %747 = vmatprep.subr.bf16.mxu0 0
        %748 = vmatpush1.bf16.msra.mxu0 %v684
        %749 = vmatprep.mubr.bf16.mxu0 %v562
        %750 = vmatmul.mubr.bf16.gmra.mrb[0].mxu0 %v561
        %v751 = vpop.f32.mrb[0].mxu0
        %v752 = vadd.f32 0.0, %v751
        %v753 = vpop.f32.mrb[0].mxu0
        %v754 = vpop.f32.mrb[0].mxu0
        %v755 = vadd.f32 0.0, %v754
        %v756 = vpop.f32.mrb[0].mxu0
        %757 = vmatprep.mubr.bf16.mxu0 %v565
        %758 = vmatmul.mubr.bf16.gmra.mrb[0].mxu0 %v564
        %v759 = vpop.f32.mrb[0].mxu0
        %v760 = vadd.f32 0.0, %v759
        %v761 = vpop.f32.mrb[0].mxu0
        %v762 = vpop.f32.mrb[0].mxu0
        %v763 = vpop.f32.mrb[0].mxu0
        %764 = vdwg.mxu0
        %765 = vmatprep.subr.bf16.mxu0 0
        %766 = vmatpush1.bf16.msra.mxu0 %v685
        %767 = vmatprep.subr.bf16.mxu0 0
        %768 = vmatpush1.bf16.msra.mxu0 %v686
        %769 = vmatprep.subr.bf16.mxu0 0
        %770 = vmatpush1.bf16.msra.mxu0 %v687
        %771 = vmatprep.subr.bf16.mxu0 0
        %772 = vmatpush1.bf16.msra.mxu0 %v688
        %773 = vmatprep.subr.bf16.mxu0 0
        %774 = vmatpush1.bf16.msra.mxu0 %v689
        %775 = vmatprep.subr.bf16.mxu0 0
        %776 = vmatpush1.bf16.msra.mxu0 %v690
        %777 = vmatprep.subr.bf16.mxu0 0
        %778 = vmatpush1.bf16.msra.mxu0 %v691
        %779 = vmatprep.subr.bf16.mxu0 0
        %780 = vmatpush1.bf16.msra.mxu0 %v692
        %781 = vmatprep.subr.bf16.mxu0 0
        %782 = vmatpush1.bf16.msra.mxu0 0
        %783 = vmatprep.subr.bf16.mxu0 0
        %784 = vmatpush1.bf16.msra.mxu0 0
        %785 = vmatprep.subr.bf16.mxu0 0
        %786 = vmatpush1.bf16.msra.mxu0 0
        %787 = vmatprep.subr.bf16.mxu0 0
        %788 = vmatpush1.bf16.msra.mxu0 0
        %789 = vmatprep.subr.bf16.mxu0 0
        %790 = vmatpush1.bf16.msra.mxu0 0
        %791 = vmatprep.subr.bf16.mxu0 0
        %792 = vmatpush1.bf16.msra.mxu0 0
        %793 = vmatprep.subr.bf16.mxu0 0
        %794 = vmatpush1.bf16.msra.mxu0 0
        %795 = vmatprep.subr.bf16.mxu0 0
        %796 = vmatpush1.bf16.msra.mxu0 0
        %797 = vmatprep.mubr.bf16.mxu0 0
        %798 = vmatmul.mubr.bf16.gmra.mrb[0].mxu0 %v563
        %v799 = vpop.f32.mrb[0].mxu0
        %v800 = vadd.f32 %v752, %v799
        %v801 = vpop.f32.mrb[0].mxu0
        %v802 = vpop.f32.mrb[0].mxu0
        %v803 = vadd.f32 %v755, %v802
        %v804 = vpop.f32.mrb[0].mxu0
        %805 = vmatprep.mubr.bf16.mxu0 0
        %806 = vmatmul.mubr.bf16.gmra.mrb[0].mxu0 %v566
        %v807 = vpop.f32.mrb[0].mxu0
        %v808 = vadd.f32 %v760, %v807
        %v809 = vpop.f32.mrb[0].mxu0
        %v810 = vpop.f32.mrb[0].mxu0
        %v811 = vpop.f32.mrb[0].mxu0
        %812 = vdwg.mxu0
        %v813 = vadd.f32 %v489, %v800
        %v814 = vadd.f32 %v490, %v803
        %v815 = vadd.f32 %v491, %v808
        %816 = vst [vmem:[#allocation2] sm:$0xff] %v813
        %817 = vst [vmem:[#allocation2 + $0x8] sm:$0xff] %v814
        %818 = vst [vmem:[#allocation2 + $0x10] sm:$0xff] %v815
        // Predicated region
        $region78: #{generator_forward.5} parent=68 // pred_check
          %p819 = pneg %p482
        $region79: #{generator_forward.5} parent=68 // pred_check_branch
          %821 = sbr.rel (%p819) target = $region81
        $region80: #{generator_forward.5} parent=68 // pred_region
          %v822 = vld [vmem:[#allocation2] sm:$0xff]
          %v823 = vld [vmem:[#allocation2 + $0x8] sm:$0xff]
          %v824 = vld [vmem:[#allocation2 + $0x10] sm:$0xff]
          %v825 = vld [vmem:[%s479] sm:$0x1]
          %v827 = vlaneseq
          %v828 = vshrl.u32 %v827, 7
          %v829 = vsub.s32 0, %v828
          %v830 = vrot.slane %v825, %v829
          %v832 = vadd.f32 %v822, %v830
          %v833 = vadd.f32 %v823, %v830
          %v834 = vadd.f32 %v824, %v830
          %835 = vst [vmem:[%s463] sm:$0xff] %v832
          %836 = vst [vmem:[%s463 + $0x8] sm:$0xff] %v833
          %837 = vst [vmem:[%s463 + $0x10] sm:$0xff] %v834
        $region81: #{generator_forward.5} parent=68 // pred_fallthru
          _
        %s838 = sand.u32 %s128, 1
        %s839 = scalar_lea.sflag [#allocation5], %s838
        %s840 = sand.u32 %s128, 1
        %s841 = smul.addr %s840, 24
        %s842 = scalar_lea.vmem [#allocation4], %s841
        // Predicated region
        $region82: #{generator_forward.5} parent=68 // pred_check
          %p843 = pneg %p138
        $region83: #{generator_forward.5} parent=68 // pred_check_branch
          %845 = sbr.rel (%p843) target = $region85
        $region84: #{generator_forward.5} parent=68 // pred_region
          %s846 = smul.u32 3, %s22
          %s848 = ssub.s32 384, 384
          %849 = vsyncadd %s839, %s848
          %s850 = smul.addr %s846, 2
          %s851 = sadd.s32 %s23, %s850
          %s852 = smul.addr %s851, 128
          %s853 = scalar_lea.hbm %s3, %s852
          %s854 = sshll.u32 %s842, 4
          %s855 = int_to_ptr.vmem [resolvable:$true] %s854
          %860 = dma.vmem_to_hbm [thread:$0]  %s855, 384, %s853, %s839, 128, 256, 8
        $region85: #{generator_forward.5} parent=68 // pred_fallthru
          _
      $region69: #{generator_forward.5} parent=5 // pred_fallthru
        _
      %p861 = scmp.le.s32.totalorder 2, %s12
      // Predicated region
      $region86: #{generator_forward.5} parent=5 // pred_check
        %p862 = pneg %p861
      $region87: #{generator_forward.5} parent=5 // pred_check_branch
        %864 = sbr.rel (%p862) target = $region89
      $region88: #{generator_forward.5} parent=5 // pred_region
        %s865 = ssub.s32 %s12, 2
        // Predicated region
        $region90: #{generator_forward.5} parent=88 // pred_check
          %p866 = pneg %p144
        $region91: #{generator_forward.5} parent=88 // pred_check_branch
          %868 = sbr.rel (%p866) target = $region93
        $region92: #{generator_forward.5} parent=88 // pred_region
          %s869 = sand.u32 %s129, 1
          %s870 = scalar_lea.sflag [#allocation5], %s869
          %s871 = sand.u32 %s129, 1
          %s872 = smul.addr %s871, 24
          %s873 = scalar_lea.vmem [#allocation4], %s872
          %874 = dma.done %s870, 384
        $region93: #{generator_forward.5} parent=88 // pred_fallthru
          _
      $region89: #{generator_forward.5} parent=5 // pred_fallthru
        _
    $region6: #{generator_forward.5} parent=1 // loop_footer
      %s16 = sadd.s32 1, %s12
    $region7: #{generator_forward.5} parent=1 // loop_footer_branch
      %11 = sbr.rel target = $region3
    $region8: #{generator_forward.5} parent=1 // loop_exit
      _
    %875 = vsyncpa [#allocation5], 1
    %s876 = scalar_lea.sflag [#allocation5], 1
    %877 = vsyncpa %s876, 1

</llo_original>
